<compile_context>
chip_gen: v7x
topology: tpu7x:2x2x1
jax: 0.10.0
libtpu: 0.0.40
codegen_flags: <defaults>
</compile_context>

<pallas_src>
import functools
import math

import jax
import jax.numpy as jnp
from jax import lax
from jax.experimental import pallas as pl
from jax.experimental.pallas import tpu as pltpu


def _round_up(x, m):
    return ((x + m - 1) // m) * m


# ---------------------------------------------------------------------------
# Kernel
# ---------------------------------------------------------------------------
def _lstm_classifier_kernel(x_ref, w_ih_ref, w_hh_ref, b_ref, w_d_ref,
                            b_d_ref, out_ref, h_ref, c_ref, gx_ref,
                            *, S_CHUNK, BB, H, unroll):
    """One grid step = one (batch block, sequence chunk).

    x_ref    : (S_CHUNK*BB, I)   chunk of the input, rows ordered (t, b)
    w_ih_ref : (I, 4H)           input->gates weight, gate order (i, f, o, g)
    w_hh_ref : (H, 4H)           hidden->gates weight, gate order (i, f, o, g)
    b_ref    : (1, 4H)           combined bias (b_ih + b_hh), f32
    w_d_ref  : (H, CP)           dense weight (transposed, lane-padded), f32
    b_d_ref  : (1, CP)           dense bias (lane-padded), f32
    out_ref  : (BB, CP)          logits for this batch block (revisited)
    h_ref    : (BB, H)  f32      hidden state carried across sequence chunks
    c_ref    : (BB, H)  f32      cell state carried across sequence chunks
    gx_ref   : (S_CHUNK*BB, 4H)  f32 per-chunk input projection scratch
    """
    si = pl.program_id(1)

    @pl.when(si == 0)
    def _init():
        h_ref[...] = jnp.zeros_like(h_ref)
        c_ref[...] = jnp.zeros_like(c_ref)

    # One big MXU pass per chunk: project every timestep through W_ih (+bias),
    # keeping the serial recurrence's critical path to just h @ W_hh + gates.
    gx_ref[...] = (
        jnp.dot(x_ref[...], w_ih_ref[...], preferred_element_type=jnp.float32)
        + b_ref[...])

    def step(t, carry):
        h, c = carry
        row = pl.multiple_of(t * BB, 8)
        # w_hh is streamed from VMEM each step (no value hoist -> no spills).
        gates = gx_ref[pl.ds(row, BB), :] + jnp.dot(
            h.astype(w_hh_ref.dtype), w_hh_ref[...],
            preferred_element_type=jnp.float32)

        # Gate order (i, f, o, g): the three sigmoids fuse into one 3H-wide op.
        # NOTE: lane slices below are tile-aligned only when H % 128 == 0.
        sig = jax.nn.sigmoid(gates[:, :3 * H])
        i_g = sig[:, 0 * H:1 * H]
        f_g = sig[:, 1 * H:2 * H]
        o_g = sig[:, 2 * H:3 * H]
        g_g = jnp.tanh(gates[:, 3 * H:4 * H])

        c = f_g * c + i_g * g_g
        h = o_g * jnp.tanh(c)
        return h, c

    h, c = lax.fori_loop(0, S_CHUNK, step, (h_ref[...], c_ref[...]),
                         unroll=unroll)
    h_ref[...] = h
    c_ref[...] = c

    @pl.when(si == pl.num_programs(1) - 1)
    def _finalize():
        out_ref[...] = (
            jnp.dot(h.astype(w_d_ref.dtype), w_d_ref[...],
                    preferred_element_type=jnp.float32)
            + b_d_ref[...])


# ---------------------------------------------------------------------------
# Parameter preprocessing (do once, outside the hot path)
# ---------------------------------------------------------------------------
def prepare_params(w_ih, w_hh, b_ih, b_hh, w_dense, b_dense,
                   *, matmul_dtype=jnp.float32):
    """Transpose / reorder PyTorch-layout LSTM + Linear params for the kernel.

    PyTorch gate order along the 4H axis is (i, f, g, o); the kernel wants
    (i, f, o, g) so the three sigmoid gates are contiguous. The dense head is
    zero-padded to a multiple of 128 output lanes (lane-dense final store).
    matmul_dtype=jnp.bfloat16 halves x/W DMA bytes and feeds the bf16 MXU on
    v6e/v7x; accumulation and all elementwise gate math stay f32.
    """
    H4, _ = w_ih.shape
    H = H4 // 4
    C = w_dense.shape[0]
    CP = _round_up(max(C, 1), 128)

    def reorder(a):  # permute 4H axis (first axis): (i, f, g, o) -> (i, f, o, g)
        i, f, g, o = jnp.split(a, 4, axis=0)
        return jnp.concatenate([i, f, o, g], axis=0)

    w_d_t = jnp.zeros((H, CP), jnp.float32)
    w_d_t = w_d_t.at[:, :C].set(jnp.transpose(w_dense).astype(jnp.float32))
    b_d = jnp.zeros((1, CP), jnp.float32)
    b_d = b_d.at[0, :C].set(b_dense.astype(jnp.float32))

    return dict(
        w_ih_t=jnp.transpose(reorder(w_ih)).astype(matmul_dtype),   # (I, 4H)
        w_hh_t=jnp.transpose(reorder(w_hh)).astype(matmul_dtype),   # (H, 4H)
        bias=reorder(b_ih + b_hh).reshape(1, H4).astype(jnp.float32),
        w_d_t=w_d_t,                                                # (H, CP)
        b_d=b_d,                                                    # (1, CP)
        classes=C,
    )


def _choose_seq_chunk(S, BB, I, H, x_bytes, budget_bytes):
    """Largest divisor of S whose chunk working set fits the VMEM budget."""
    per_t = BB * (2 * I * x_bytes + 4 * H * 4)   # double-buffered x + f32 gates
    max_chunk = max(1, budget_bytes // max(per_t, 1))
    max_chunk = int(min(max_chunk, 256, S))
    for d in range(max_chunk, 0, -1):
        if S % d == 0:
            return d
    return 1
    # TODO(synk): for prime/awkward S this degrades to tiny chunks; pad S and
    # mask the trailing timesteps instead if that ever matters.


# ---------------------------------------------------------------------------
# Wrapper
# ---------------------------------------------------------------------------
def lstm_classifier_apply(params, x, *, seq_chunk_budget_bytes=16 << 20):
    """x: (S, B, I) float32. Returns logits (B, classes)."""
    S, B, I = x.shape
    w_ih_t, w_hh_t = params["w_ih_t"], params["w_hh_t"]
    bias, w_d_t, b_d = params["bias"], params["w_d_t"], params["b_d"]
    C = params["classes"]

    H = w_hh_t.shape[0]
    H4 = 4 * H
    CP = w_d_t.shape[1]
    x_dtype = w_ih_t.dtype
    x_bytes = jnp.dtype(x_dtype).itemsize

    # Batch blocking: pad to a multiple of 16 sublanes (bf16-safe packing);
    # blocks of up to 128 rows feed a "parallel" grid axis (v7x 2nd core).
    # At tiny batch the recurrence is latency/EUP-bound; batching more
    # sequences (BB >= 128) is the real lever, not per-step micro-opts.
    BB = min(_round_up(B, 16), 128)
    NB = -(-B // BB)
    BP = NB * BB

    S_CHUNK = _choose_seq_chunk(S, BB, I, H, x_bytes, seq_chunk_budget_bytes)
    NS = S // S_CHUNK

    # Wrapper-side layout plumbing: (S, B, I) -> (NB, S*BB, I) so each grid
    # step gets a contiguous (S_CHUNK*BB, I) slab with rows ordered (t, b).
    x_p = jnp.pad(x.astype(jnp.float32), ((0, 0), (0, BP - B), (0, 0)))
    x_p = x_p.reshape(S, NB, BB, I).transpose(1, 0, 2, 3).reshape(NB, S * BB, I)
    x_p = x_p.astype(x_dtype)

    kernel = functools.partial(
        _lstm_classifier_kernel,
        S_CHUNK=S_CHUNK, BB=BB, H=H, unroll=min(8, S_CHUNK))

    # Explicit scoped-VMEM limit sized from the actual buffers (+ headroom),
    # capped below v7x's 64 MiB physical VMEM.
    est = (2 * S_CHUNK * BB * I * x_bytes       # x block, double-buffered
           + S_CHUNK * BB * H4 * 4              # gates_x scratch (f32)
           + (I + H) * H4 * x_bytes             # W_ih + W_hh
           + H4 * 4 + H * CP * 4 + CP * 4       # bias + dense weights
           + 2 * BB * H * 4                     # h, c scratch
           + 2 * BB * CP * 4)                   # output block, double-buffered
    vmem_limit = int(min(max(est + (8 << 20), 32 << 20), 60 << 20))

    grid_spec = pltpu.PrefetchScalarGridSpec(
        num_scalar_prefetch=0,
        grid=(NB, NS),
        in_specs=[
            pl.BlockSpec((None, S_CHUNK * BB, I), lambda bi, si: (bi, si, 0)),
            pl.BlockSpec((I, H4), lambda bi, si: (0, 0)),
            pl.BlockSpec((H, H4), lambda bi, si: (0, 0)),
            pl.BlockSpec((1, H4), lambda bi, si: (0, 0)),
            pl.BlockSpec((H, CP), lambda bi, si: (0, 0)),
            pl.BlockSpec((1, CP), lambda bi, si: (0, 0)),
        ],
        out_specs=pl.BlockSpec((BB, CP), lambda bi, si: (bi, 0)),
        scratch_shapes=[
            pltpu.VMEM((BB, H), jnp.float32),            # h
            pltpu.VMEM((BB, H), jnp.float32),            # c
            pltpu.VMEM((S_CHUNK * BB, H4), jnp.float32), # gates_x
        ],
    )

    out_p = pl.pallas_call(
        kernel,
        out_shape=jax.ShapeDtypeStruct((BP, CP), jnp.float32),
        grid_spec=grid_spec,
        compiler_params=pltpu.CompilerParams(
            dimension_semantics=("parallel", "arbitrary"),
            vmem_limit_bytes=vmem_limit),
    )(x_p, w_ih_t, w_hh_t, bias, w_d_t, b_d)

    return out_p[:B, :C]


def lstm_classifier(x, w_ih, w_hh, b_ih, b_hh, w_dense, b_dense,
                    *, matmul_dtype=jnp.float32):
    """Convenience one-shot entry point (preprocess + apply)."""
    return lstm_classifier_apply(
        prepare_params(w_ih, w_hh, b_ih, b_hh, w_dense, b_dense,
                       matmul_dtype=matmul_dtype), x)


# ---------------------------------------------------------------------------
# Pure-JAX reference (PyTorch semantics, original gate order) for verification
# ---------------------------------------------------------------------------
def reference_forward(x, w_ih, w_hh, b_ih, b_hh, w_dense, b_dense):
    S, B, I = x.shape
    H = w_hh.shape[1]
    h = jnp.zeros((B, H), jnp.float32)
    c = jnp.zeros((B, H), jnp.float32)
    for t in range(S):
        gates = x[t] @ w_ih.T + b_ih + h @ w_hh.T + b_hh
        i_g = jax.nn.sigmoid(gates[:, 0 * H:1 * H])
        f_g = jax.nn.sigmoid(gates[:, 1 * H:2 * H])
        g_g = jnp.tanh(gates[:, 2 * H:3 * H])
        o_g = jax.nn.sigmoid(gates[:, 3 * H:4 * H])
        c = f_g * c + i_g * g_g
        h = o_g * jnp.tanh(c)
    return h @ w_dense.T + b_dense


if __name__ == "__main__":
    classes, input_size, hidden_size = 10, 28, 128
    seq_len, batch = 8, 2

    key = jax.random.PRNGKey(0)
    ks = jax.random.split(key, 8)
    k_lstm = 1.0 / math.sqrt(hidden_size)   # PyTorch nn.LSTM init range
    k_lin = 1.0 / math.sqrt(hidden_size)    # PyTorch nn.Linear init range

    w_ih = jax.random.uniform(ks[0], (4 * hidden_size, input_size),
                              jnp.float32, -k_lstm, k_lstm)
    w_hh = jax.random.uniform(ks[1], (4 * hidden_size, hidden_size),
                              jnp.float32, -k_lstm, k_lstm)
    b_ih = jax.random.uniform(ks[2], (4 * hidden_size,), jnp.float32,
                              -k_lstm, k_lstm)
    b_hh = jax.random.uniform(ks[3], (4 * hidden_size,), jnp.float32,
                              -k_lstm, k_lstm)
    w_dense = jax.random.uniform(ks[4], (classes, hidden_size), jnp.float32,
                                 -k_lin, k_lin)
    b_dense = jax.random.uniform(ks[5], (classes,), jnp.float32, -k_lin, k_lin)

    x = jax.random.normal(ks[6], (seq_len, batch, input_size), jnp.float32)

    ref = reference_forward(x, w_ih, w_hh, b_ih, b_hh, w_dense, b_dense)

    # f32 matmul operands: exact check against the f32 reference.
    params_f32 = prepare_params(w_ih, w_hh, b_ih, b_hh, w_dense, b_dense,
                                matmul_dtype=jnp.float32)
    out_f32 = jax.block_until_ready(lstm_classifier_apply(params_f32, x))
    assert out_f32.shape == (batch, classes), out_f32.shape
    assert jnp.allclose(out_f32, ref, atol=1e-4, rtol=1e-4), (out_f32, ref)

    # bf16 matmul operands (perf config for v6e/v7x): f32 accumulation keeps
    # drift small; looser tolerance vs. the f32 reference.
    params_bf16 = prepare_params(w_ih, w_hh, b_ih, b_hh, w_dense, b_dense,
                                 matmul_dtype=jnp.bfloat16)
    out_bf16 = jax.block_until_ready(lstm_classifier_apply(params_bf16, x))
    assert out_bf16.shape == (batch, classes), out_bf16.shape
    assert jnp.allclose(out_bf16, ref, atol=3e-2, rtol=3e-2), (out_bf16, ref)

    print("KERNEL_OK")
</pallas_src>

<mosaic_0001>
module attributes {stable_mosaic.version = 11 : i64} {
  func.func @_lstm_classifier_kernel(%arg0: i32, %arg1: i32, %arg2: memref<1x128x28xf32, #tpu.memory_space<vmem>>, %arg3: memref<28x512xf32, #tpu.memory_space<vmem>>, %arg4: memref<128x512xf32, #tpu.memory_space<vmem>>, %arg5: memref<1x512xf32, #tpu.memory_space<vmem>>, %arg6: memref<128x128xf32, #tpu.memory_space<vmem>>, %arg7: memref<1x128xf32, #tpu.memory_space<vmem>>, %arg8: memref<16x128xf32, #tpu.memory_space<vmem>>, %arg9: memref<16x128xf32, #tpu.memory_space<vmem>>, %arg10: memref<16x128xf32, #tpu.memory_space<vmem>>, %arg11: memref<128x512xf32, #tpu.memory_space<vmem>>) attributes {dimension_semantics = [#tpu.dimension_semantics<parallel>, #tpu.dimension_semantics<arbitrary>], iteration_bounds = array<i64: 1, 1>, scalar_prefetch = 0 : i64, scratch_operands = 3 : i64, tpu.core_type = #tpu.core_type<tc>, window_params = [{transform_indices = @transform_0, window_bounds = array<i64: 1, 128, 28>}, {pipeline_mode = #tpu.pipeline_mode<synchronous>, transform_indices = @transform_1, window_bounds = array<i64: 28, 512>}, {pipeline_mode = #tpu.pipeline_mode<synchronous>, transform_indices = @transform_2, window_bounds = array<i64: 128, 512>}, {pipeline_mode = #tpu.pipeline_mode<synchronous>, transform_indices = @transform_3, window_bounds = array<i64: 1, 512>}, {pipeline_mode = #tpu.pipeline_mode<synchronous>, transform_indices = @transform_4, window_bounds = array<i64: 128, 128>}, {pipeline_mode = #tpu.pipeline_mode<synchronous>, transform_indices = @transform_5, window_bounds = array<i64: 1, 128>}, {transform_indices = @transform_6, window_bounds = array<i64: 16, 128>}]} {
    %c0_i32 = arith.constant 0 : i32
    %0 = arith.cmpi eq, %arg1, %c0_i32 : i32
    %1 = arith.extui %0 : i1 to i32
    %c0_i32_0 = arith.constant 0 : i32
    %2 = arith.cmpi ne, %1, %c0_i32_0 : i32
    scf.if %2 {
      %cst_67 = arith.constant 0.000000e+00 : f32
      %202 = vector.broadcast %cst_67 : f32 to vector<16x128xf32>
      %c0_68 = arith.constant 0 : index
      %c0_69 = arith.constant 0 : index
      %203 = vector.load %arg9[%c0_68, %c0_69] : memref<16x128xf32, #tpu.memory_space<vmem>>, vector<16x128xf32>
      tpu.vector_store %arg9[%c0_68, %c0_69], %202 {strides = array<i32>} : memref<16x128xf32, #tpu.memory_space<vmem>>, vector<16x128xf32>,
      %cst_70 = arith.constant 0.000000e+00 : f32
      %204 = vector.broadcast %cst_70 : f32 to vector<16x128xf32>
      %c0_71 = arith.constant 0 : index
      %c0_72 = arith.constant 0 : index
      %205 = vector.load %arg10[%c0_71, %c0_72] : memref<16x128xf32, #tpu.memory_space<vmem>>, vector<16x128xf32>
      tpu.vector_store %arg10[%c0_71, %c0_72], %204 {strides = array<i32>} : memref<16x128xf32, #tpu.memory_space<vmem>>, vector<16x128xf32>,
    } else {
    }
    %c0 = arith.constant 0 : index
    %c0_1 = arith.constant 0 : index
    %c0_2 = arith.constant 0 : index
    %3 = vector.load %arg2[%c0, %c0_1, %c0_2] : memref<1x128x28xf32, #tpu.memory_space<vmem>>, vector<1x128x28xf32>
    %4 = vector.shape_cast %3 : vector<1x128x28xf32> to vector<128x28xf32>
    %c0_3 = arith.constant 0 : index
    %c0_4 = arith.constant 0 : index
    %5 = vector.load %arg3[%c0_3, %c0_4] : memref<28x512xf32, #tpu.memory_space<vmem>>, vector<28x512xf32>
    %cst = arith.constant dense<0.000000e+00> : vector<128x512xf32>
    %6 = tpu.matmul %4, %5, %cst {dimension_numbers = #tpu.dot_dimension_numbers<[1], [0], [0], [1], [0, 0, 1, 1], [], []>} : vector<128x28xf32>, vector<28x512xf32>, vector<128x512xf32> -> vector<128x512xf32>
    %c0_5 = arith.constant 0 : index
    %c0_6 = arith.constant 0 : index
    %7 = vector.load %arg5[%c0_5, %c0_6] : memref<1x512xf32, #tpu.memory_space<vmem>>, vector<1x512xf32>
    %8 = vector.broadcast %7 : vector<1x512xf32> to vector<128x512xf32>
    %9 = arith.addf %6, %8 : vector<128x512xf32>
    %c0_7 = arith.constant 0 : index
    %c0_8 = arith.constant 0 : index
    %10 = vector.load %arg11[%c0_7, %c0_8] : memref<128x512xf32, #tpu.memory_space<vmem>>, vector<128x512xf32>
    tpu.vector_store %arg11[%c0_7, %c0_8], %9 {strides = array<i32>} : memref<128x512xf32, #tpu.memory_space<vmem>>, vector<128x512xf32>,
    %c0_9 = arith.constant 0 : index
    %c0_10 = arith.constant 0 : index
    %11 = vector.load %arg9[%c0_9, %c0_10] : memref<16x128xf32, #tpu.memory_space<vmem>>, vector<16x128xf32>
    %c0_11 = arith.constant 0 : index
    %c0_12 = arith.constant 0 : index
    %12 = vector.load %arg10[%c0_11, %c0_12] : memref<16x128xf32, #tpu.memory_space<vmem>>, vector<16x128xf32>
    %c0_i32_13 = arith.constant 0 : i32
    %c16_i32 = arith.constant 16 : i32
    %13 = arith.muli %c0_i32_13, %c16_i32 : i32
    %14 = tpu.assume_multiple %13, 8 : i32
    %15 = arith.index_cast %14 : i32 to index
    %c0_14 = arith.constant 0 : index
    %16 = vector.load %arg11[%15, %c0_14] : memref<128x512xf32, #tpu.memory_space<vmem>>, vector<16x512xf32>
    %c0_15 = arith.constant 0 : index
    %c0_16 = arith.constant 0 : index
    %17 = vector.load %arg4[%c0_15, %c0_16] : memref<128x512xf32, #tpu.memory_space<vmem>>, vector<128x512xf32>
    %cst_17 = arith.constant dense<0.000000e+00> : vector<16x512xf32>
    %18 = tpu.matmul %11, %17, %cst_17 {dimension_numbers = #tpu.dot_dimension_numbers<[1], [0], [0], [1], [0, 0, 1, 1], [], []>} : vector<16x128xf32>, vector<128x512xf32>, vector<16x512xf32> -> vector<16x512xf32>
    %19 = arith.addf %16, %18 : vector<16x512xf32>
    %20 = vector.extract_strided_slice %19 {offsets = [0, 0], sizes = [16, 384], strides = [1, 1]} : vector<16x512xf32> to vector<16x384xf32>
    %21 = arith.negf %20 : vector<16x384xf32>
    %22 = math.exp %21 : vector<16x384xf32>
    %cst_18 = arith.constant 1.000000e+00 : f32
    %23 = vector.broadcast %cst_18 : f32 to vector<16x384xf32>
    %24 = arith.addf %23, %22 : vector<16x384xf32>
    %25 = arith.divf %23, %24 : vector<16x384xf32>
    %26 = vector.extract_strided_slice %25 {offsets = [0, 0], sizes = [16, 128], strides = [1, 1]} : vector<16x384xf32> to vector<16x128xf32>
    %27 = vector.extract_strided_slice %25 {offsets = [0, 128], sizes = [16, 128], strides = [1, 1]} : vector<16x384xf32> to vector<16x128xf32>
    %28 = vector.extract_strided_slice %25 {offsets = [0, 256], sizes = [16, 128], strides = [1, 1]} : vector<16x384xf32> to vector<16x128xf32>
    %29 = vector.extract_strided_slice %19 {offsets = [0, 384], sizes = [16, 128], strides = [1, 1]} : vector<16x512xf32> to vector<16x128xf32>
    %30 = math.tanh %29 : vector<16x128xf32>
    %31 = arith.mulf %27, %12 : vector<16x128xf32>
    %32 = arith.mulf %26, %30 : vector<16x128xf32>
    %33 = arith.addf %31, %32 : vector<16x128xf32>
    %34 = math.tanh %33 : vector<16x128xf32>
    %35 = arith.mulf %28, %34 : vector<16x128xf32>
    %c1_i32 = arith.constant 1 : i32
    %c16_i32_19 = arith.constant 16 : i32
    %36 = arith.muli %c1_i32, %c16_i32_19 : i32
    %37 = tpu.assume_multiple %36, 8 : i32
    %38 = arith.index_cast %37 : i32 to index
    %c0_20 = arith.constant 0 : index
    %39 = vector.load %arg11[%38, %c0_20] : memref<128x512xf32, #tpu.memory_space<vmem>>, vector<16x512xf32>
    %c0_21 = arith.constant 0 : index
    %c0_22 = arith.constant 0 : index
    %40 = vector.load %arg4[%c0_21, %c0_22] : memref<128x512xf32, #tpu.memory_space<vmem>>, vector<128x512xf32>
    %cst_23 = arith.constant dense<0.000000e+00> : vector<16x512xf32>
    %41 = tpu.matmul %35, %40, %cst_23 {dimension_numbers = #tpu.dot_dimension_numbers<[1], [0], [0], [1], [0, 0, 1, 1], [], []>} : vector<16x128xf32>, vector<128x512xf32>, vector<16x512xf32> -> vector<16x512xf32>
    %42 = arith.addf %39, %41 : vector<16x512xf32>
    %43 = vector.extract_strided_slice %42 {offsets = [0, 0], sizes = [16, 384], strides = [1, 1]} : vector<16x512xf32> to vector<16x384xf32>
    %44 = arith.negf %43 : vector<16x384xf32>
    %45 = math.exp %44 : vector<16x384xf32>
    %cst_24 = arith.constant 1.000000e+00 : f32
    %46 = vector.broadcast %cst_24 : f32 to vector<16x384xf32>
    %47 = arith.addf %46, %45 : vector<16x384xf32>
    %48 = arith.divf %46, %47 : vector<16x384xf32>
    %49 = vector.extract_strided_slice %48 {offsets = [0, 0], sizes = [16, 128], strides = [1, 1]} : vector<16x384xf32> to vector<16x128xf32>
    %50 = vector.extract_strided_slice %48 {offsets = [0, 128], sizes = [16, 128], strides = [1, 1]} : vector<16x384xf32> to vector<16x128xf32>
    %51 = vector.extract_strided_slice %48 {offsets = [0, 256], sizes = [16, 128], strides = [1, 1]} : vector<16x384xf32> to vector<16x128xf32>
    %52 = vector.extract_strided_slice %42 {offsets = [0, 384], sizes = [16, 128], strides = [1, 1]} : vector<16x512xf32> to vector<16x128xf32>
    %53 = math.tanh %52 : vector<16x128xf32>
    %54 = arith.mulf %50, %33 : vector<16x128xf32>
    %55 = arith.mulf %49, %53 : vector<16x128xf32>
    %56 = arith.addf %54, %55 : vector<16x128xf32>
    %57 = math.tanh %56 : vector<16x128xf32>
    %58 = arith.mulf %51, %57 : vector<16x128xf32>
    %c2_i32 = arith.constant 2 : i32
    %c16_i32_25 = arith.constant 16 : i32
    %59 = arith.muli %c2_i32, %c16_i32_25 : i32
    %60 = tpu.assume_multiple %59, 8 : i32
    %61 = arith.index_cast %60 : i32 to index
    %c0_26 = arith.constant 0 : index
    %62 = vector.load %arg11[%61, %c0_26] : memref<128x512xf32, #tpu.memory_space<vmem>>, vector<16x512xf32>
    %c0_27 = arith.constant 0 : index
    %c0_28 = arith.constant 0 : index
    %63 = vector.load %arg4[%c0_27, %c0_28] : memref<128x512xf32, #tpu.memory_space<vmem>>, vector<128x512xf32>
    %cst_29 = arith.constant dense<0.000000e+00> : vector<16x512xf32>
    %64 = tpu.matmul %58, %63, %cst_29 {dimension_numbers = #tpu.dot_dimension_numbers<[1], [0], [0], [1], [0, 0, 1, 1], [], []>} : vector<16x128xf32>, vector<128x512xf32>, vector<16x512xf32> -> vector<16x512xf32>
    %65 = arith.addf %62, %64 : vector<16x512xf32>
    %66 = vector.extract_strided_slice %65 {offsets = [0, 0], sizes = [16, 384], strides = [1, 1]} : vector<16x512xf32> to vector<16x384xf32>
    %67 = arith.negf %66 : vector<16x384xf32>
    %68 = math.exp %67 : vector<16x384xf32>
    %cst_30 = arith.constant 1.000000e+00 : f32
    %69 = vector.broadcast %cst_30 : f32 to vector<16x384xf32>
    %70 = arith.addf %69, %68 : vector<16x384xf32>
    %71 = arith.divf %69, %70 : vector<16x384xf32>
    %72 = vector.extract_strided_slice %71 {offsets = [0, 0], sizes = [16, 128], strides = [1, 1]} : vector<16x384xf32> to vector<16x128xf32>
    %73 = vector.extract_strided_slice %71 {offsets = [0, 128], sizes = [16, 128], strides = [1, 1]} : vector<16x384xf32> to vector<16x128xf32>
    %74 = vector.extract_strided_slice %71 {offsets = [0, 256], sizes = [16, 128], strides = [1, 1]} : vector<16x384xf32> to vector<16x128xf32>
    %75 = vector.extract_strided_slice %65 {offsets = [0, 384], sizes = [16, 128], strides = [1, 1]} : vector<16x512xf32> to vector<16x128xf32>
    %76 = math.tanh %75 : vector<16x128xf32>
    %77 = arith.mulf %73, %56 : vector<16x128xf32>
    %78 = arith.mulf %72, %76 : vector<16x128xf32>
    %79 = arith.addf %77, %78 : vector<16x128xf32>
    %80 = math.tanh %79 : vector<16x128xf32>
    %81 = arith.mulf %74, %80 : vector<16x128xf32>
    %c3_i32 = arith.constant 3 : i32
    %c16_i32_31 = arith.constant 16 : i32
    %82 = arith.muli %c3_i32, %c16_i32_31 : i32
    %83 = tpu.assume_multiple %82, 8 : i32
    %84 = arith.index_cast %83 : i32 to index
    %c0_32 = arith.constant 0 : index
    %85 = vector.load %arg11[%84, %c0_32] : memref<128x512xf32, #tpu.memory_space<vmem>>, vector<16x512xf32>
    %c0_33 = arith.constant 0 : index
    %c0_34 = arith.constant 0 : index
    %86 = vector.load %arg4[%c0_33, %c0_34] : memref<128x512xf32, #tpu.memory_space<vmem>>, vector<128x512xf32>
    %cst_35 = arith.constant dense<0.000000e+00> : vector<16x512xf32>
    %87 = tpu.matmul %81, %86, %cst_35 {dimension_numbers = #tpu.dot_dimension_numbers<[1], [0], [0], [1], [0, 0, 1, 1], [], []>} : vector<16x128xf32>, vector<128x512xf32>, vector<16x512xf32> -> vector<16x512xf32>
    %88 = arith.addf %85, %87 : vector<16x512xf32>
    %89 = vector.extract_strided_slice %88 {offsets = [0, 0], sizes = [16, 384], strides = [1, 1]} : vector<16x512xf32> to vector<16x384xf32>
    %90 = arith.negf %89 : vector<16x384xf32>
    %91 = math.exp %90 : vector<16x384xf32>
    %cst_36 = arith.constant 1.000000e+00 : f32
    %92 = vector.broadcast %cst_36 : f32 to vector<16x384xf32>
    %93 = arith.addf %92, %91 : vector<16x384xf32>
    %94 = arith.divf %92, %93 : vector<16x384xf32>
    %95 = vector.extract_strided_slice %94 {offsets = [0, 0], sizes = [16, 128], strides = [1, 1]} : vector<16x384xf32> to vector<16x128xf32>
    %96 = vector.extract_strided_slice %94 {offsets = [0, 128], sizes = [16, 128], strides = [1, 1]} : vector<16x384xf32> to vector<16x128xf32>
    %97 = vector.extract_strided_slice %94 {offsets = [0, 256], sizes = [16, 128], strides = [1, 1]} : vector<16x384xf32> to vector<16x128xf32>
    %98 = vector.extract_strided_slice %88 {offsets = [0, 384], sizes = [16, 128], strides = [1, 1]} : vector<16x512xf32> to vector<16x128xf32>
    %99 = math.tanh %98 : vector<16x128xf32>
    %100 = arith.mulf %96, %79 : vector<16x128xf32>
    %101 = arith.mulf %95, %99 : vector<16x128xf32>
    %102 = arith.addf %100, %101 : vector<16x128xf32>
    %103 = math.tanh %102 : vector<16x128xf32>
    %104 = arith.mulf %97, %103 : vector<16x128xf32>
    %c4_i32 = arith.constant 4 : i32
    %c16_i32_37 = arith.constant 16 : i32
    %105 = arith.muli %c4_i32, %c16_i32_37 : i32
    %106 = tpu.assume_multiple %105, 8 : i32
    %107 = arith.index_cast %106 : i32 to index
    %c0_38 = arith.constant 0 : index
    %108 = vector.load %arg11[%107, %c0_38] : memref<128x512xf32, #tpu.memory_space<vmem>>, vector<16x512xf32>
    %c0_39 = arith.constant 0 : index
    %c0_40 = arith.constant 0 : index
    %109 = vector.load %arg4[%c0_39, %c0_40] : memref<128x512xf32, #tpu.memory_space<vmem>>, vector<128x512xf32>
    %cst_41 = arith.constant dense<0.000000e+00> : vector<16x512xf32>
    %110 = tpu.matmul %104, %109, %cst_41 {dimension_numbers = #tpu.dot_dimension_numbers<[1], [0], [0], [1], [0, 0, 1, 1], [], []>} : vector<16x128xf32>, vector<128x512xf32>, vector<16x512xf32> -> vector<16x512xf32>
    %111 = arith.addf %108, %110 : vector<16x512xf32>
    %112 = vector.extract_strided_slice %111 {offsets = [0, 0], sizes = [16, 384], strides = [1, 1]} : vector<16x512xf32> to vector<16x384xf32>
    %113 = arith.negf %112 : vector<16x384xf32>
    %114 = math.exp %113 : vector<16x384xf32>
    %cst_42 = arith.constant 1.000000e+00 : f32
    %115 = vector.broadcast %cst_42 : f32 to vector<16x384xf32>
    %116 = arith.addf %115, %114 : vector<16x384xf32>
    %117 = arith.divf %115, %116 : vector<16x384xf32>
    %118 = vector.extract_strided_slice %117 {offsets = [0, 0], sizes = [16, 128], strides = [1, 1]} : vector<16x384xf32> to vector<16x128xf32>
    %119 = vector.extract_strided_slice %117 {offsets = [0, 128], sizes = [16, 128], strides = [1, 1]} : vector<16x384xf32> to vector<16x128xf32>
    %120 = vector.extract_strided_slice %117 {offsets = [0, 256], sizes = [16, 128], strides = [1, 1]} : vector<16x384xf32> to vector<16x128xf32>
    %121 = vector.extract_strided_slice %111 {offsets = [0, 384], sizes = [16, 128], strides = [1, 1]} : vector<16x512xf32> to vector<16x128xf32>
    %122 = math.tanh %121 : vector<16x128xf32>
    %123 = arith.mulf %119, %102 : vector<16x128xf32>
    %124 = arith.mulf %118, %122 : vector<16x128xf32>
    %125 = arith.addf %123, %124 : vector<16x128xf32>
    %126 = math.tanh %125 : vector<16x128xf32>
    %127 = arith.mulf %120, %126 : vector<16x128xf32>
    %c5_i32 = arith.constant 5 : i32
    %c16_i32_43 = arith.constant 16 : i32
    %128 = arith.muli %c5_i32, %c16_i32_43 : i32
    %129 = tpu.assume_multiple %128, 8 : i32
    %130 = arith.index_cast %129 : i32 to index
    %c0_44 = arith.constant 0 : index
    %131 = vector.load %arg11[%130, %c0_44] : memref<128x512xf32, #tpu.memory_space<vmem>>, vector<16x512xf32>
    %c0_45 = arith.constant 0 : index
    %c0_46 = arith.constant 0 : index
    %132 = vector.load %arg4[%c0_45, %c0_46] : memref<128x512xf32, #tpu.memory_space<vmem>>, vector<128x512xf32>
    %cst_47 = arith.constant dense<0.000000e+00> : vector<16x512xf32>
    %133 = tpu.matmul %127, %132, %cst_47 {dimension_numbers = #tpu.dot_dimension_numbers<[1], [0], [0], [1], [0, 0, 1, 1], [], []>} : vector<16x128xf32>, vector<128x512xf32>, vector<16x512xf32> -> vector<16x512xf32>
    %134 = arith.addf %131, %133 : vector<16x512xf32>
    %135 = vector.extract_strided_slice %134 {offsets = [0, 0], sizes = [16, 384], strides = [1, 1]} : vector<16x512xf32> to vector<16x384xf32>
    %136 = arith.negf %135 : vector<16x384xf32>
    %137 = math.exp %136 : vector<16x384xf32>
    %cst_48 = arith.constant 1.000000e+00 : f32
    %138 = vector.broadcast %cst_48 : f32 to vector<16x384xf32>
    %139 = arith.addf %138, %137 : vector<16x384xf32>
    %140 = arith.divf %138, %139 : vector<16x384xf32>
    %141 = vector.extract_strided_slice %140 {offsets = [0, 0], sizes = [16, 128], strides = [1, 1]} : vector<16x384xf32> to vector<16x128xf32>
    %142 = vector.extract_strided_slice %140 {offsets = [0, 128], sizes = [16, 128], strides = [1, 1]} : vector<16x384xf32> to vector<16x128xf32>
    %143 = vector.extract_strided_slice %140 {offsets = [0, 256], sizes = [16, 128], strides = [1, 1]} : vector<16x384xf32> to vector<16x128xf32>
    %144 = vector.extract_strided_slice %134 {offsets = [0, 384], sizes = [16, 128], strides = [1, 1]} : vector<16x512xf32> to vector<16x128xf32>
    %145 = math.tanh %144 : vector<16x128xf32>
    %146 = arith.mulf %142, %125 : vector<16x128xf32>
    %147 = arith.mulf %141, %145 : vector<16x128xf32>
    %148 = arith.addf %146, %147 : vector<16x128xf32>
    %149 = math.tanh %148 : vector<16x128xf32>
    %150 = arith.mulf %143, %149 : vector<16x128xf32>
    %c6_i32 = arith.constant 6 : i32
    %c16_i32_49 = arith.constant 16 : i32
    %151 = arith.muli %c6_i32, %c16_i32_49 : i32
    %152 = tpu.assume_multiple %151, 8 : i32
    %153 = arith.index_cast %152 : i32 to index
    %c0_50 = arith.constant 0 : index
    %154 = vector.load %arg11[%153, %c0_50] : memref<128x512xf32, #tpu.memory_space<vmem>>, vector<16x512xf32>
    %c0_51 = arith.constant 0 : index
    %c0_52 = arith.constant 0 : index
    %155 = vector.load %arg4[%c0_51, %c0_52] : memref<128x512xf32, #tpu.memory_space<vmem>>, vector<128x512xf32>
    %cst_53 = arith.constant dense<0.000000e+00> : vector<16x512xf32>
    %156 = tpu.matmul %150, %155, %cst_53 {dimension_numbers = #tpu.dot_dimension_numbers<[1], [0], [0], [1], [0, 0, 1, 1], [], []>} : vector<16x128xf32>, vector<128x512xf32>, vector<16x512xf32> -> vector<16x512xf32>
    %157 = arith.addf %154, %156 : vector<16x512xf32>
    %158 = vector.extract_strided_slice %157 {offsets = [0, 0], sizes = [16, 384], strides = [1, 1]} : vector<16x512xf32> to vector<16x384xf32>
    %159 = arith.negf %158 : vector<16x384xf32>
    %160 = math.exp %159 : vector<16x384xf32>
    %cst_54 = arith.constant 1.000000e+00 : f32
    %161 = vector.broadcast %cst_54 : f32 to vector<16x384xf32>
    %162 = arith.addf %161, %160 : vector<16x384xf32>
    %163 = arith.divf %161, %162 : vector<16x384xf32>
    %164 = vector.extract_strided_slice %163 {offsets = [0, 0], sizes = [16, 128], strides = [1, 1]} : vector<16x384xf32> to vector<16x128xf32>
    %165 = vector.extract_strided_slice %163 {offsets = [0, 128], sizes = [16, 128], strides = [1, 1]} : vector<16x384xf32> to vector<16x128xf32>
    %166 = vector.extract_strided_slice %163 {offsets = [0, 256], sizes = [16, 128], strides = [1, 1]} : vector<16x384xf32> to vector<16x128xf32>
    %167 = vector.extract_strided_slice %157 {offsets = [0, 384], sizes = [16, 128], strides = [1, 1]} : vector<16x512xf32> to vector<16x128xf32>
    %168 = math.tanh %167 : vector<16x128xf32>
    %169 = arith.mulf %165, %148 : vector<16x128xf32>
    %170 = arith.mulf %164, %168 : vector<16x128xf32>
    %171 = arith.addf %169, %170 : vector<16x128xf32>
    %172 = math.tanh %171 : vector<16x128xf32>
    %173 = arith.mulf %166, %172 : vector<16x128xf32>
    %c7_i32 = arith.constant 7 : i32
    %c16_i32_55 = arith.constant 16 : i32
    %174 = arith.muli %c7_i32, %c16_i32_55 : i32
    %175 = tpu.assume_multiple %174, 8 : i32
    %176 = arith.index_cast %175 : i32 to index
    %c0_56 = arith.constant 0 : index
    %177 = vector.load %arg11[%176, %c0_56] : memref<128x512xf32, #tpu.memory_space<vmem>>, vector<16x512xf32>
    %c0_57 = arith.constant 0 : index
    %c0_58 = arith.constant 0 : index
    %178 = vector.load %arg4[%c0_57, %c0_58] : memref<128x512xf32, #tpu.memory_space<vmem>>, vector<128x512xf32>
    %cst_59 = arith.constant dense<0.000000e+00> : vector<16x512xf32>
    %179 = tpu.matmul %173, %178, %cst_59 {dimension_numbers = #tpu.dot_dimension_numbers<[1], [0], [0], [1], [0, 0, 1, 1], [], []>} : vector<16x128xf32>, vector<128x512xf32>, vector<16x512xf32> -> vector<16x512xf32>
    %180 = arith.addf %177, %179 : vector<16x512xf32>
    %181 = vector.extract_strided_slice %180 {offsets = [0, 0], sizes = [16, 384], strides = [1, 1]} : vector<16x512xf32> to vector<16x384xf32>
    %182 = arith.negf %181 : vector<16x384xf32>
    %183 = math.exp %182 : vector<16x384xf32>
    %cst_60 = arith.constant 1.000000e+00 : f32
    %184 = vector.broadcast %cst_60 : f32 to vector<16x384xf32>
    %185 = arith.addf %184, %183 : vector<16x384xf32>
    %186 = arith.divf %184, %185 : vector<16x384xf32>
    %187 = vector.extract_strided_slice %186 {offsets = [0, 0], sizes = [16, 128], strides = [1, 1]} : vector<16x384xf32> to vector<16x128xf32>
    %188 = vector.extract_strided_slice %186 {offsets = [0, 128], sizes = [16, 128], strides = [1, 1]} : vector<16x384xf32> to vector<16x128xf32>
    %189 = vector.extract_strided_slice %186 {offsets = [0, 256], sizes = [16, 128], strides = [1, 1]} : vector<16x384xf32> to vector<16x128xf32>
    %190 = vector.extract_strided_slice %180 {offsets = [0, 384], sizes = [16, 128], strides = [1, 1]} : vector<16x512xf32> to vector<16x128xf32>
    %191 = math.tanh %190 : vector<16x128xf32>
    %192 = arith.mulf %188, %171 : vector<16x128xf32>
    %193 = arith.mulf %187, %191 : vector<16x128xf32>
    %194 = arith.addf %192, %193 : vector<16x128xf32>
    %195 = math.tanh %194 : vector<16x128xf32>
    %196 = arith.mulf %189, %195 : vector<16x128xf32>
    %c8_i32 = arith.constant 8 : i32
    %c0_61 = arith.constant 0 : index
    %c0_62 = arith.constant 0 : index
    %197 = vector.load %arg9[%c0_61, %c0_62] : memref<16x128xf32, #tpu.memory_space<vmem>>, vector<16x128xf32>
    tpu.vector_store %arg9[%c0_61, %c0_62], %196 {strides = array<i32>} : memref<16x128xf32, #tpu.memory_space<vmem>>, vector<16x128xf32>,
    %c0_63 = arith.constant 0 : index
    %c0_64 = arith.constant 0 : index
    %198 = vector.load %arg10[%c0_63, %c0_64] : memref<16x128xf32, #tpu.memory_space<vmem>>, vector<16x128xf32>
    tpu.vector_store %arg10[%c0_63, %c0_64], %194 {strides = array<i32>} : memref<16x128xf32, #tpu.memory_space<vmem>>, vector<16x128xf32>,
    %c0_i32_65 = arith.constant 0 : i32
    %199 = arith.cmpi eq, %arg1, %c0_i32_65 : i32
    %200 = arith.extui %199 : i1 to i32
    %c0_i32_66 = arith.constant 0 : i32
    %201 = arith.cmpi ne, %200, %c0_i32_66 : i32
    scf.if %201 {
      %c0_67 = arith.constant 0 : index
      %c0_68 = arith.constant 0 : index
      %202 = vector.load %arg6[%c0_67, %c0_68] : memref<128x128xf32, #tpu.memory_space<vmem>>, vector<128x128xf32>
      %cst_69 = arith.constant dense<0.000000e+00> : vector<16x128xf32>
      %203 = tpu.matmul %196, %202, %cst_69 {dimension_numbers = #tpu.dot_dimension_numbers<[1], [0], [0], [1], [0, 0, 1, 1], [], []>} : vector<16x128xf32>, vector<128x128xf32>, vector<16x128xf32> -> vector<16x128xf32>
      %c0_70 = arith.constant 0 : index
      %c0_71 = arith.constant 0 : index
      %204 = vector.load %arg7[%c0_70, %c0_71] : memref<1x128xf32, #tpu.memory_space<vmem>>, vector<1x128xf32>
      %205 = vector.broadcast %204 : vector<1x128xf32> to vector<16x128xf32>
      %206 = arith.addf %203, %205 : vector<16x128xf32>
      %c0_72 = arith.constant 0 : index
      %c0_73 = arith.constant 0 : index
      %207 = vector.load %arg8[%c0_72, %c0_73] : memref<16x128xf32, #tpu.memory_space<vmem>>, vector<16x128xf32>
      tpu.vector_store %arg8[%c0_72, %c0_73], %206 {strides = array<i32>} : memref<16x128xf32, #tpu.memory_space<vmem>>, vector<16x128xf32>,
    } else {
    }
    return
  }
  func.func @transform_0(%arg0: i32, %arg1: i32) -> (i32, i32, i32) {
    %c0_i32 = arith.constant 0 : i32
    %c0_i32_0 = arith.constant 0 : i32
    return %arg0, %arg1, %c0_i32 : i32, i32, i32
  }
  func.func @transform_1(%arg0: i32, %arg1: i32) -> (i32, i32) {
    %c0_i32 = arith.constant 0 : i32
    %c0_i32_0 = arith.constant 0 : i32
    %c0_i32_1 = arith.constant 0 : i32
    return %c0_i32, %c0_i32_0 : i32, i32
  }
  func.func @transform_2(%arg0: i32, %arg1: i32) -> (i32, i32) {
    %c0_i32 = arith.constant 0 : i32
    %c0_i32_0 = arith.constant 0 : i32
    %c0_i32_1 = arith.constant 0 : i32
    return %c0_i32, %c0_i32_0 : i32, i32
  }
  func.func @transform_3(%arg0: i32, %arg1: i32) -> (i32, i32) {
    %c0_i32 = arith.constant 0 : i32
    %c0_i32_0 = arith.constant 0 : i32
    %c0_i32_1 = arith.constant 0 : i32
    return %c0_i32, %c0_i32_0 : i32, i32
  }
  func.func @transform_4(%arg0: i32, %arg1: i32) -> (i32, i32) {
    %c0_i32 = arith.constant 0 : i32
    %c0_i32_0 = arith.constant 0 : i32
    %c0_i32_1 = arith.constant 0 : i32
    return %c0_i32, %c0_i32_0 : i32, i32
  }
  func.func @transform_5(%arg0: i32, %arg1: i32) -> (i32, i32) {
    %c0_i32 = arith.constant 0 : i32
    %c0_i32_0 = arith.constant 0 : i32
    %c0_i32_1 = arith.constant 0 : i32
    return %c0_i32, %c0_i32_0 : i32, i32
  }
  func.func @transform_6(%arg0: i32, %arg1: i32) -> (i32, i32) {
    %c0_i32 = arith.constant 0 : i32
    %c0_i32_0 = arith.constant 0 : i32
    return %arg0, %c0_i32 : i32, i32
  }
}

</mosaic_0001>

<llo_original>
// kernel: tpu_custom_call.1
$region0: #{tpu_custom_call.1}
  #allocation0 [shape = 'u32[]', space=smem, size = 0x4, offset = 0x4, fixed_abs, tag = 'smem constant byte address 0x4 - core index']
  #allocation1 [shape = 'u32[144,128]{1,0:T(1,128)}', space=vmem, size = 0x12000, scoped, tag = 'internal scratch']
  #allocation2 [shape = 'f32[16,128]{1,0:T(8,128)}', space=vmem, size = 0x2000, scoped, tag = 'scratch operand']
  #allocation3 [shape = 'f32[16,128]{1,0:T(8,128)}', space=vmem, size = 0x2000, scoped, tag = 'scratch operand']
  #allocation4 [shape = 'f32[128,512]{1,0:T(8,128)}', space=vmem, size = 0x40000, scoped, tag = 'scratch operand']
  %s0 = inlined_call_operand.vmem [shape: f32[1,128,28], index: 0, kind: input, shape index: {}]
  %s1 = inlined_call_operand.vmem [shape: f32[28,512], index: 1, kind: input, shape index: {}]
  %s2 = inlined_call_operand.hbm [shape: f32[128,512], index: 2, kind: input, shape index: {}]
  %s3 = inlined_call_operand.vmem [shape: f32[1,512], index: 3, kind: input, shape index: {}]
  %s4 = inlined_call_operand.hbm [shape: f32[128,128], index: 4, kind: input, shape index: {}]
  %s5 = inlined_call_operand.vmem [shape: f32[1,128], index: 5, kind: input, shape index: {}]
  %s6 = inlined_call_operand.hbm [shape: f32[16,128], index: 6, kind: output, shape index: {}]
  %s7 = sld [smem:[#allocation0]]
  $region50: #{tpu_custom_call.1} parent=0
    _
  %s9 = ssub.s32 1, %s7
  %s10 = scalar_select 0, %s9, %s7
  $region1: #{tpu_custom_call.1} parent=0
    #allocation5 [shape = 'u8[262144]{0}', space=vmem, size = 0x40000, scoped, tag = 'input window, operand 2, single buffered']
    #allocation6 [shape = 's32[1]{0}', space=sflag, size = 0x4, scoped, tag = 'scoped memory for tpu_custom_call.1']
    #allocation7 [shape = 's32[1]{0}', space=sflag, size = 0x4, scoped, tag = 'scoped memory for tpu_custom_call.1']
    #allocation8 [shape = 'u8[65536]{0}', space=vmem, size = 0x10000, scoped, tag = 'input window, operand 4, single buffered']
    #allocation9 [shape = 's32[1]{0}', space=sflag, size = 0x4, scoped, tag = 'scoped memory for tpu_custom_call.1']
    #allocation10 [shape = 'u8[8192]{0}', space=vmem, size = 0x2000, scoped, tag = 'output window, operand 0, single buffered']
    %11 = vsyncpa [#allocation6], 0
    %12 = vsyncpa [#allocation9], 0
    %13 = vsyncpa [#allocation7], 0
    // Predicated region
    $region2: #{tpu_custom_call.1} parent=1 // pred_check
      _
    $region3: #{tpu_custom_call.1} parent=1 // pred_check_branch
      %15 = sbr.rel (0) target = $region5
    $region4: #{tpu_custom_call.1} parent=1 // pred_region
      _
    $region5: #{tpu_custom_call.1} parent=1 // pred_fallthru
      _
    // Predicated region
    $region6: #{tpu_custom_call.1} parent=1 // pred_check
      _
    $region7: #{tpu_custom_call.1} parent=1 // pred_check_branch
      %17 = sbr.rel (0) target = $region9
    $region8: #{tpu_custom_call.1} parent=1 // pred_region
      _
    $region9: #{tpu_custom_call.1} parent=1 // pred_fallthru
      _
    // Predicated region
    $region10: #{tpu_custom_call.1} parent=1 // pred_check
      _
    $region11: #{tpu_custom_call.1} parent=1 // pred_check_branch
      %19 = sbr.rel (0) target = $region13
    $region12: #{tpu_custom_call.1} parent=1 // pred_region
      %s21 = ssub.s32 8192, 8192
      %22 = vsyncadd [#allocation6], %s21
      %s23 = sshll.u32 [#allocation5], 4
      %s24 = int_to_ptr.vmem [resolvable:$true] %s23
      %29 = dma.hbm_to_vmem [thread:$0]  %s2, 8192, %s24, [#allocation6], 512, 512, 32
    $region13: #{tpu_custom_call.1} parent=1 // pred_fallthru
      _
    // Predicated region
    $region14: #{tpu_custom_call.1} parent=1 // pred_check
      _
    $region15: #{tpu_custom_call.1} parent=1 // pred_check_branch
      %31 = sbr.rel (0) target = $region17
    $region16: #{tpu_custom_call.1} parent=1 // pred_region
      _
    $region17: #{tpu_custom_call.1} parent=1 // pred_fallthru
      _
    // Predicated region
    $region18: #{tpu_custom_call.1} parent=1 // pred_check
      _
    $region19: #{tpu_custom_call.1} parent=1 // pred_check_branch
      %33 = sbr.rel (0) target = $region21
    $region20: #{tpu_custom_call.1} parent=1 // pred_region
      %s35 = ssub.s32 2048, 2048
      %36 = vsyncadd [#allocation9], %s35
      %s37 = sshll.u32 [#allocation8], 4
      %s38 = int_to_ptr.vmem [resolvable:$true] %s37
      %43 = dma.hbm_to_vmem [thread:$0]  %s4, 2048, %s38, [#allocation9], 128, 128, 8
    $region21: #{tpu_custom_call.1} parent=1 // pred_fallthru
      _
    // Predicated region
    $region22: #{tpu_custom_call.1} parent=1 // pred_check
      _
    $region23: #{tpu_custom_call.1} parent=1 // pred_check_branch
      %45 = sbr.rel (0) target = $region25
    $region24: #{tpu_custom_call.1} parent=1 // pred_region
      _
    $region25: #{tpu_custom_call.1} parent=1 // pred_fallthru
      _
    // Predicated region
    $region26: #{tpu_custom_call.1} parent=1 // pred_check
      _
    $region27: #{tpu_custom_call.1} parent=1 // pred_check_branch
      %47 = sbr.rel (0) target = $region29
    $region28: #{tpu_custom_call.1} parent=1 // pred_region
      %48 = dma.done [#allocation6], 8192
    $region29: #{tpu_custom_call.1} parent=1 // pred_fallthru
      _
    // Predicated region
    $region30: #{tpu_custom_call.1} parent=1 // pred_check
      _
    $region31: #{tpu_custom_call.1} parent=1 // pred_check_branch
      %50 = sbr.rel (0) target = $region33
    $region32: #{tpu_custom_call.1} parent=1 // pred_region
      %51 = dma.done [#allocation9], 2048
    $region33: #{tpu_custom_call.1} parent=1 // pred_fallthru
      _
    %p52 = scmp.eq.s32.totalorder 0, 0
    // Predicated region
    $region34: #{tpu_custom_call.1} parent=1 // pred_check
      %p53 = pneg %p52
    $region35: #{tpu_custom_call.1} parent=1 // pred_check_branch
      %55 = sbr.rel (%p53) target = $region37
    $region36: #{tpu_custom_call.1} parent=1 // pred_region
      %56 = vst [vmem:[#allocation2] sm:$0xff] 0.0
      %57 = vst [vmem:[#allocation2 + $0x8] sm:$0xff] 0.0
      %58 = vst [vmem:[#allocation3] sm:$0xff] 0.0
      %59 = vst [vmem:[#allocation3 + $0x8] sm:$0xff] 0.0
    $region37: #{tpu_custom_call.1} parent=1 // pred_fallthru
      _
    %v60 = vld [vmem:[%s0] sm:$0xff]
    %v61 = vld [vmem:[%s0 + $0x8] sm:$0xff]
    %v62 = vld [vmem:[%s0 + $0x10] sm:$0xff]
    %v63 = vld [vmem:[%s0 + $0x18] sm:$0xff]
    %v64 = vld [vmem:[%s0 + $0x20] sm:$0xff]
    %v65 = vld [vmem:[%s0 + $0x28] sm:$0xff]
    %v66 = vld [vmem:[%s0 + $0x30] sm:$0xff]
    %v67 = vld [vmem:[%s0 + $0x38] sm:$0xff]
    %v68 = vld [vmem:[%s0 + $0x40] sm:$0xff]
    %v69 = vld [vmem:[%s0 + $0x48] sm:$0xff]
    %v70 = vld [vmem:[%s0 + $0x50] sm:$0xff]
    %v71 = vld [vmem:[%s0 + $0x58] sm:$0xff]
    %v72 = vld [vmem:[%s0 + $0x60] sm:$0xff]
    %v73 = vld [vmem:[%s0 + $0x68] sm:$0xff]
    %v74 = vld [vmem:[%s0 + $0x70] sm:$0xff]
    %v75 = vld [vmem:[%s0 + $0x78] sm:$0xff]
    %v76 = vld [vmem:[%s1] sm:$0xff]
    %v77 = vld [vmem:[%s1 + $0x8] sm:$0xff]
    %v78 = vld [vmem:[%s1 + $0x10] sm:$0xff]
    %v79 = vld [vmem:[%s1 + $0x18] sm:$0xff]
    %v80 = vld [vmem:[%s1 + $0x20] sm:$0xff]
    %v81 = vld [vmem:[%s1 + $0x28] sm:$0xff]
    %v82 = vld [vmem:[%s1 + $0x30] sm:$0xff]
    %v83 = vld [vmem:[%s1 + $0x38] sm:$0xff]
    %v84 = vld [vmem:[%s1 + $0x40] sm:$0xff]
    %v85 = vld [vmem:[%s1 + $0x48] sm:$0xff]
    %v86 = vld [vmem:[%s1 + $0x50] sm:$0xff]
    %v87 = vld [vmem:[%s1 + $0x58] sm:$0xff]
    %v88 = vld [vmem:[%s1 + $0x60] sm:$0xf]
    %v89 = vld [vmem:[%s1 + $0x68] sm:$0xf]
    %v90 = vld [vmem:[%s1 + $0x70] sm:$0xf]
    %v91 = vld [vmem:[%s1 + $0x78] sm:$0xf]
    %v92 = vld [vmem:[%s3] sm:$0xf]
    %v94 = vlaneseq
    %v95 = vshrl.u32 %v94, 7
    %v96 = vsub.s32 0, %v95
    %v97 = vrot.slane %v92, %v96
    %v98 = vlaneseq
    %v99 = vshrl.u32 %v98, 7
    %v100 = vsub.s32 1, %v99
    %v101 = vrot.slane %v92, %v100
    %v102 = vlaneseq
    %v103 = vshrl.u32 %v102, 7
    %v104 = vsub.s32 2, %v103
    %v105 = vrot.slane %v92, %v104
    %v106 = vlaneseq
    %v107 = vshrl.u32 %v106, 7
    %v108 = vsub.s32 3, %v107
    %v109 = vrot.slane %v92, %v108
    %vm114 = vcmask 228352
    %v116 = vsel %vm114, %v60, 0
    %v119 = vsel %vm114, %v61, 0
    %v122 = vsel %vm114, %v62, 0
    %v125 = vsel %vm114, %v63, 0
    %v128 = vsel %vm114, %v64, 0
    %v131 = vsel %vm114, %v65, 0
    %v134 = vsel %vm114, %v66, 0
    %v137 = vsel %vm114, %v67, 0
    %v140 = vsel %vm114, %v68, 0
    %v143 = vsel %vm114, %v69, 0
    %v146 = vsel %vm114, %v70, 0
    %v149 = vsel %vm114, %v71, 0
    %v152 = vsel %vm114, %v72, 0
    %v155 = vsel %vm114, %v73, 0
    %v158 = vsel %vm114, %v74, 0
    %v161 = vsel %vm114, %v75, 0
    %vm163 = vcmask 1043456
    %v165 = vsel %vm163, %v88, 0
    %v168 = vsel %vm163, %v89, 0
    %v171 = vsel %vm163, %v90, 0
    %v174 = vsel %vm163, %v91, 0
    %176 = vmatprep.subr.mxu0 %v77
    %177 = vmatpush1.msra.mxu0 %v76
    %178 = vmatprep.subr.mxu0 %v81
    %179 = vmatpush1.msra.mxu0 %v80
    %180 = vmatprep.subr.mxu0 %v85
    %181 = vmatpush1.msra.mxu0 %v84
    %182 = vmatprep.subr.mxu0 %v168
    %183 = vmatpush1.msra.mxu0 %v165
    %184 = vmatprep.subr.mxu0 0.0
    %185 = vmatpush1.msra.mxu0 0.0
    %186 = vmatprep.subr.mxu0 0.0
    %187 = vmatpush1.msra.mxu0 0.0
    %188 = vmatprep.subr.mxu0 0.0
    %189 = vmatpush1.msra.mxu0 0.0
    %190 = vmatprep.subr.mxu0 0.0
    %191 = vmatpush1.msra.mxu0 0.0
    %192 = vmatprep.subr.mxu0 0.0
    %193 = vmatpush1.msra.mxu0 0.0
    %194 = vmatprep.subr.mxu0 0.0
    %195 = vmatpush1.msra.mxu0 0.0
    %196 = vmatprep.subr.mxu0 0.0
    %197 = vmatpush1.msra.mxu0 0.0
    %198 = vmatprep.subr.mxu0 0.0
    %199 = vmatpush1.msra.mxu0 0.0
    %200 = vmatprep.subr.mxu0 0.0
    %201 = vmatpush1.msra.mxu0 0.0
    %202 = vmatprep.subr.mxu0 0.0
    %203 = vmatpush1.msra.mxu0 0.0
    %204 = vmatprep.subr.mxu0 0.0
    %205 = vmatpush1.msra.mxu0 0.0
    %206 = vmatprep.subr.mxu0 0.0
    %207 = vmatpush1.msra.mxu0 0.0
    %208 = vmatprep.subr.mxu0 0.0
    %209 = vmatpush1.msra.mxu0 0.0
    %210 = vmatprep.subr.mxu0 0.0
    %211 = vmatpush1.msra.mxu0 0.0
    %212 = vmatprep.subr.mxu0 0.0
    %213 = vmatpush1.msra.mxu0 0.0
    %214 = vmatprep.subr.mxu0 0.0
    %215 = vmatpush1.msra.mxu0 0.0
    %216 = vmatprep.subr.mxu0 0.0
    %217 = vmatpush1.msra.mxu0 0.0
    %218 = vmatprep.subr.mxu0 0.0
    %219 = vmatpush1.msra.mxu0 0.0
    %220 = vmatprep.subr.mxu0 0.0
    %221 = vmatpush1.msra.mxu0 0.0
    %222 = vmatprep.subr.mxu0 0.0
    %223 = vmatpush1.msra.mxu0 0.0
    %224 = vmatprep.subr.mxu0 0.0
    %225 = vmatpush1.msra.mxu0 0.0
    %226 = vmatprep.subr.mxu0 0.0
    %227 = vmatpush1.msra.mxu0 0.0
    %228 = vmatprep.subr.mxu0 0.0
    %229 = vmatpush1.msra.mxu0 0.0
    %230 = vmatprep.subr.mxu0 0.0
    %231 = vmatpush1.msra.mxu0 0.0
    %232 = vmatprep.subr.mxu0 0.0
    %233 = vmatpush1.msra.mxu0 0.0
    %234 = vmatprep.subr.mxu0 0.0
    %235 = vmatpush1.msra.mxu0 0.0
    %236 = vmatprep.subr.mxu0 0.0
    %237 = vmatpush1.msra.mxu0 0.0
    %238 = vmatprep.subr.mxu0 0.0
    %239 = vmatpush1.msra.mxu0 0.0
    %240 = vmatprep.mubr.f32.mxu0 0.0
    %241 = vmatmul.mubr.f32.gmra.mrb[0].mxu0 %v116
    %v242 = vpop.f32.mrb[0].mxu0
    %v243 = vadd.f32 %v97, %v242
    %v244 = vpop.f32.mrb[0].mxu0
    %v245 = vadd.f32 %v101, %v244
    %246 = vmatprep.mubr.f32.mxu0 0.0
    %247 = vmatmul.mubr.f32.gmra.mrb[0].mxu0 %v119
    %v248 = vpop.f32.mrb[0].mxu0
    %v249 = vadd.f32 %v97, %v248
    %v250 = vpop.f32.mrb[0].mxu0
    %v251 = vadd.f32 %v101, %v250
    %252 = vmatprep.mubr.f32.mxu0 0.0
    %253 = vmatmul.mubr.f32.gmra.mrb[0].mxu0 %v122
    %v254 = vpop.f32.mrb[0].mxu0
    %v255 = vadd.f32 %v97, %v254
    %v256 = vpop.f32.mrb[0].mxu0
    %v257 = vadd.f32 %v101, %v256
    %258 = vmatprep.mubr.f32.mxu0 0.0
    %259 = vmatmul.mubr.f32.gmra.mrb[0].mxu0 %v125
    %v260 = vpop.f32.mrb[0].mxu0
    %v261 = vadd.f32 %v97, %v260
    %v262 = vpop.f32.mrb[0].mxu0
    %v263 = vadd.f32 %v101, %v262
    %264 = vmatprep.mubr.f32.mxu0 0.0
    %265 = vmatmul.mubr.f32.gmra.mrb[0].mxu0 %v128
    %v266 = vpop.f32.mrb[0].mxu0
    %v267 = vadd.f32 %v97, %v266
    %v268 = vpop.f32.mrb[0].mxu0
    %v269 = vadd.f32 %v101, %v268
    %270 = vmatprep.mubr.f32.mxu0 0.0
    %271 = vmatmul.mubr.f32.gmra.mrb[0].mxu0 %v131
    %v272 = vpop.f32.mrb[0].mxu0
    %v273 = vadd.f32 %v97, %v272
    %v274 = vpop.f32.mrb[0].mxu0
    %v275 = vadd.f32 %v101, %v274
    %276 = vmatprep.mubr.f32.mxu0 0.0
    %277 = vmatmul.mubr.f32.gmra.mrb[0].mxu0 %v134
    %v278 = vpop.f32.mrb[0].mxu0
    %v279 = vadd.f32 %v97, %v278
    %v280 = vpop.f32.mrb[0].mxu0
    %v281 = vadd.f32 %v101, %v280
    %282 = vmatprep.mubr.f32.mxu0 0.0
    %283 = vmatmul.mubr.f32.gmra.mrb[0].mxu0 %v137
    %v284 = vpop.f32.mrb[0].mxu0
    %v285 = vadd.f32 %v97, %v284
    %v286 = vpop.f32.mrb[0].mxu0
    %v287 = vadd.f32 %v101, %v286
    %288 = vmatprep.mubr.f32.mxu0 0.0
    %289 = vmatmul.mubr.f32.gmra.mrb[0].mxu0 %v140
    %v290 = vpop.f32.mrb[0].mxu0
    %v291 = vadd.f32 %v97, %v290
    %v292 = vpop.f32.mrb[0].mxu0
    %v293 = vadd.f32 %v101, %v292
    %294 = vmatprep.mubr.f32.mxu0 0.0
    %295 = vmatmul.mubr.f32.gmra.mrb[0].mxu0 %v143
    %v296 = vpop.f32.mrb[0].mxu0
    %v297 = vadd.f32 %v97, %v296
    %v298 = vpop.f32.mrb[0].mxu0
    %v299 = vadd.f32 %v101, %v298
    %300 = vmatprep.mubr.f32.mxu0 0.0
    %301 = vmatmul.mubr.f32.gmra.mrb[0].mxu0 %v146
    %v302 = vpop.f32.mrb[0].mxu0
    %v303 = vadd.f32 %v97, %v302
    %v304 = vpop.f32.mrb[0].mxu0
    %v305 = vadd.f32 %v101, %v304
    %306 = vmatprep.mubr.f32.mxu0 0.0
    %307 = vmatmul.mubr.f32.gmra.mrb[0].mxu0 %v149
    %v308 = vpop.f32.mrb[0].mxu0
    %v309 = vadd.f32 %v97, %v308
    %v310 = vpop.f32.mrb[0].mxu0
    %v311 = vadd.f32 %v101, %v310
    %312 = vmatprep.mubr.f32.mxu0 0.0
    %313 = vmatmul.mubr.f32.gmra.mrb[0].mxu0 %v152
    %v314 = vpop.f32.mrb[0].mxu0
    %v315 = vadd.f32 %v97, %v314
    %v316 = vpop.f32.mrb[0].mxu0
    %v317 = vadd.f32 %v101, %v316
    %318 = vmatprep.mubr.f32.mxu0 0.0
    %319 = vmatmul.mubr.f32.gmra.mrb[0].mxu0 %v155
    %v320 = vpop.f32.mrb[0].mxu0
    %v321 = vadd.f32 %v97, %v320
    %v322 = vpop.f32.mrb[0].mxu0
    %v323 = vadd.f32 %v101, %v322
    %324 = vmatprep.mubr.f32.mxu0 0.0
    %325 = vmatmul.mubr.f32.gmra.mrb[0].mxu0 %v158
    %v326 = vpop.f32.mrb[0].mxu0
    %v327 = vadd.f32 %v97, %v326
    %v328 = vpop.f32.mrb[0].mxu0
    %v329 = vadd.f32 %v101, %v328
    %330 = vmatprep.mubr.f32.mxu0 0.0
    %331 = vmatmul.mubr.f32.gmra.mrb[0].mxu0 %v161
    %v332 = vpop.f32.mrb[0].mxu0
    %v333 = vadd.f32 %v97, %v332
    %v334 = vpop.f32.mrb[0].mxu0
    %v335 = vadd.f32 %v101, %v334
    %336 = vdwg.mxu0
    %337 = vmatprep.subr.mxu0 %v79
    %338 = vmatpush1.msra.mxu0 %v78
    %339 = vmatprep.subr.mxu0 %v83
    %340 = vmatpush1.msra.mxu0 %v82
    %341 = vmatprep.subr.mxu0 %v87
    %342 = vmatpush1.msra.mxu0 %v86
    %343 = vmatprep.subr.mxu0 %v174
    %344 = vmatpush1.msra.mxu0 %v171
    %345 = vmatprep.subr.mxu0 0.0
    %346 = vmatpush1.msra.mxu0 0.0
    %347 = vmatprep.subr.mxu0 0.0
    %348 = vmatpush1.msra.mxu0 0.0
    %349 = vmatprep.subr.mxu0 0.0
    %350 = vmatpush1.msra.mxu0 0.0
    %351 = vmatprep.subr.mxu0 0.0
    %352 = vmatpush1.msra.mxu0 0.0
    %353 = vmatprep.subr.mxu0 0.0
    %354 = vmatpush1.msra.mxu0 0.0
    %355 = vmatprep.subr.mxu0 0.0
    %356 = vmatpush1.msra.mxu0 0.0
    %357 = vmatprep.subr.mxu0 0.0
    %358 = vmatpush1.msra.mxu0 0.0
    %359 = vmatprep.subr.mxu0 0.0
    %360 = vmatpush1.msra.mxu0 0.0
    %361 = vmatprep.subr.mxu0 0.0
    %362 = vmatpush1.msra.mxu0 0.0
    %363 = vmatprep.subr.mxu0 0.0
    %364 = vmatpush1.msra.mxu0 0.0
    %365 = vmatprep.subr.mxu0 0.0
    %366 = vmatpush1.msra.mxu0 0.0
    %367 = vmatprep.subr.mxu0 0.0
    %368 = vmatpush1.msra.mxu0 0.0
    %369 = vmatprep.subr.mxu0 0.0
    %370 = vmatpush1.msra.mxu0 0.0
    %371 = vmatprep.subr.mxu0 0.0
    %372 = vmatpush1.msra.mxu0 0.0
    %373 = vmatprep.subr.mxu0 0.0
    %374 = vmatpush1.msra.mxu0 0.0
    %375 = vmatprep.subr.mxu0 0.0
    %376 = vmatpush1.msra.mxu0 0.0
    %377 = vmatprep.subr.mxu0 0.0
    %378 = vmatpush1.msra.mxu0 0.0
    %379 = vmatprep.subr.mxu0 0.0
    %380 = vmatpush1.msra.mxu0 0.0
    %381 = vmatprep.subr.mxu0 0.0
    %382 = vmatpush1.msra.mxu0 0.0
    %383 = vmatprep.subr.mxu0 0.0
    %384 = vmatpush1.msra.mxu0 0.0
    %385 = vmatprep.subr.mxu0 0.0
    %386 = vmatpush1.msra.mxu0 0.0
    %387 = vmatprep.subr.mxu0 0.0
    %388 = vmatpush1.msra.mxu0 0.0
    %389 = vmatprep.subr.mxu0 0.0
    %390 = vmatpush1.msra.mxu0 0.0
    %391 = vmatprep.subr.mxu0 0.0
    %392 = vmatpush1.msra.mxu0 0.0
    %393 = vmatprep.subr.mxu0 0.0
    %394 = vmatpush1.msra.mxu0 0.0
    %395 = vmatprep.subr.mxu0 0.0
    %396 = vmatpush1.msra.mxu0 0.0
    %397 = vmatprep.subr.mxu0 0.0
    %398 = vmatpush1.msra.mxu0 0.0
    %399 = vmatprep.subr.mxu0 0.0
    %400 = vmatpush1.msra.mxu0 0.0
    %401 = vmatprep.mubr.f32.mxu0 0.0
    %402 = vmatmul.mubr.f32.gmra.mrb[0].mxu0 %v116
    %v403 = vpop.f32.mrb[0].mxu0
    %v404 = vadd.f32 %v105, %v403
    %v405 = vpop.f32.mrb[0].mxu0
    %v406 = vadd.f32 %v109, %v405
    %407 = vmatprep.mubr.f32.mxu0 0.0
    %408 = vmatmul.mubr.f32.gmra.mrb[0].mxu0 %v119
    %v409 = vpop.f32.mrb[0].mxu0
    %v410 = vadd.f32 %v105, %v409
    %v411 = vpop.f32.mrb[0].mxu0
    %v412 = vadd.f32 %v109, %v411
    %413 = vmatprep.mubr.f32.mxu0 0.0
    %414 = vmatmul.mubr.f32.gmra.mrb[0].mxu0 %v122
    %v415 = vpop.f32.mrb[0].mxu0
    %v416 = vadd.f32 %v105, %v415
    %v417 = vpop.f32.mrb[0].mxu0
    %v418 = vadd.f32 %v109, %v417
    %419 = vmatprep.mubr.f32.mxu0 0.0
    %420 = vmatmul.mubr.f32.gmra.mrb[0].mxu0 %v125
    %v421 = vpop.f32.mrb[0].mxu0
    %v422 = vadd.f32 %v105, %v421
    %v423 = vpop.f32.mrb[0].mxu0
    %v424 = vadd.f32 %v109, %v423
    %425 = vmatprep.mubr.f32.mxu0 0.0
    %426 = vmatmul.mubr.f32.gmra.mrb[0].mxu0 %v128
    %v427 = vpop.f32.mrb[0].mxu0
    %v428 = vadd.f32 %v105, %v427
    %v429 = vpop.f32.mrb[0].mxu0
    %v430 = vadd.f32 %v109, %v429
    %431 = vmatprep.mubr.f32.mxu0 0.0
    %432 = vmatmul.mubr.f32.gmra.mrb[0].mxu0 %v131
    %v433 = vpop.f32.mrb[0].mxu0
    %v434 = vadd.f32 %v105, %v433
    %v435 = vpop.f32.mrb[0].mxu0
    %v436 = vadd.f32 %v109, %v435
    %437 = vmatprep.mubr.f32.mxu0 0.0
    %438 = vmatmul.mubr.f32.gmra.mrb[0].mxu0 %v134
    %v439 = vpop.f32.mrb[0].mxu0
    %v440 = vadd.f32 %v105, %v439
    %v441 = vpop.f32.mrb[0].mxu0
    %v442 = vadd.f32 %v109, %v441
    %443 = vmatprep.mubr.f32.mxu0 0.0
    %444 = vmatmul.mubr.f32.gmra.mrb[0].mxu0 %v137
    %v445 = vpop.f32.mrb[0].mxu0
    %v446 = vadd.f32 %v105, %v445
    %v447 = vpop.f32.mrb[0].mxu0
    %v448 = vadd.f32 %v109, %v447
    %449 = vmatprep.mubr.f32.mxu0 0.0
    %450 = vmatmul.mubr.f32.gmra.mrb[0].mxu0 %v140
    %v451 = vpop.f32.mrb[0].mxu0
    %v452 = vadd.f32 %v105, %v451
    %v453 = vpop.f32.mrb[0].mxu0
    %v454 = vadd.f32 %v109, %v453
    %455 = vmatprep.mubr.f32.mxu0 0.0
    %456 = vmatmul.mubr.f32.gmra.mrb[0].mxu0 %v143
    %v457 = vpop.f32.mrb[0].mxu0
    %v458 = vadd.f32 %v105, %v457
    %v459 = vpop.f32.mrb[0].mxu0
    %v460 = vadd.f32 %v109, %v459
    %461 = vmatprep.mubr.f32.mxu0 0.0
    %462 = vmatmul.mubr.f32.gmra.mrb[0].mxu0 %v146
    %v463 = vpop.f32.mrb[0].mxu0
    %v464 = vadd.f32 %v105, %v463
    %v465 = vpop.f32.mrb[0].mxu0
    %v466 = vadd.f32 %v109, %v465
    %467 = vmatprep.mubr.f32.mxu0 0.0
    %468 = vmatmul.mubr.f32.gmra.mrb[0].mxu0 %v149
    %v469 = vpop.f32.mrb[0].mxu0
    %v470 = vadd.f32 %v105, %v469
    %v471 = vpop.f32.mrb[0].mxu0
    %v472 = vadd.f32 %v109, %v471
    %473 = vmatprep.mubr.f32.mxu0 0.0
    %474 = vmatmul.mubr.f32.gmra.mrb[0].mxu0 %v152
    %v475 = vpop.f32.mrb[0].mxu0
    %v476 = vadd.f32 %v105, %v475
    %v477 = vpop.f32.mrb[0].mxu0
    %v478 = vadd.f32 %v109, %v477
    %479 = vmatprep.mubr.f32.mxu0 0.0
    %480 = vmatmul.mubr.f32.gmra.mrb[0].mxu0 %v155
    %v481 = vpop.f32.mrb[0].mxu0
    %v482 = vadd.f32 %v105, %v481
    %v483 = vpop.f32.mrb[0].mxu0
    %v484 = vadd.f32 %v109, %v483
    %485 = vmatprep.mubr.f32.mxu0 0.0
    %486 = vmatmul.mubr.f32.gmra.mrb[0].mxu0 %v158
    %v487 = vpop.f32.mrb[0].mxu0
    %v488 = vadd.f32 %v105, %v487
    %v489 = vpop.f32.mrb[0].mxu0
    %v490 = vadd.f32 %v109, %v489
    %491 = vmatprep.mubr.f32.mxu0 0.0
    %492 = vmatmul.mubr.f32.gmra.mrb[0].mxu0 %v161
    %v493 = vpop.f32.mrb[0].mxu0
    %v494 = vadd.f32 %v105, %v493
    %v495 = vpop.f32.mrb[0].mxu0
    %v496 = vadd.f32 %v109, %v495
    %497 = vdwg.mxu0
    %498 = vst [vmem:[#allocation4] sm:$0xff] %v243
    %499 = vst [vmem:[#allocation4 + $0x8] sm:$0xff] %v245
    %500 = vst [vmem:[#allocation4 + $0x10] sm:$0xff] %v404
    %501 = vst [vmem:[#allocation4 + $0x18] sm:$0xff] %v406
    %502 = vst [vmem:[#allocation4 + $0x20] sm:$0xff] %v249
    %503 = vst [vmem:[#allocation4 + $0x28] sm:$0xff] %v251
    %504 = vst [vmem:[#allocation4 + $0x30] sm:$0xff] %v410
    %505 = vst [vmem:[#allocation4 + $0x38] sm:$0xff] %v412
    %506 = vst [vmem:[#allocation4 + $0x40] sm:$0xff] %v255
    %507 = vst [vmem:[#allocation4 + $0x48] sm:$0xff] %v257
    %508 = vst [vmem:[#allocation4 + $0x50] sm:$0xff] %v416
    %509 = vst [vmem:[#allocation4 + $0x58] sm:$0xff] %v418
    %510 = vst [vmem:[#allocation4 + $0x60] sm:$0xff] %v261
    %511 = vst [vmem:[#allocation4 + $0x68] sm:$0xff] %v263
    %512 = vst [vmem:[#allocation4 + $0x70] sm:$0xff] %v422
    %513 = vst [vmem:[#allocation4 + $0x78] sm:$0xff] %v424
    %514 = vst [vmem:[#allocation4 + $0x80] sm:$0xff] %v267
    %515 = vst [vmem:[#allocation4 + $0x88] sm:$0xff] %v269
    %516 = vst [vmem:[#allocation4 + $0x90] sm:$0xff] %v428
    %517 = vst [vmem:[#allocation4 + $0x98] sm:$0xff] %v430
    %518 = vst [vmem:[#allocation4 + $0xa0] sm:$0xff] %v273
    %519 = vst [vmem:[#allocation4 + $0xa8] sm:$0xff] %v275
    %520 = vst [vmem:[#allocation4 + $0xb0] sm:$0xff] %v434
    %521 = vst [vmem:[#allocation4 + $0xb8] sm:$0xff] %v436
    %522 = vst [vmem:[#allocation4 + $0xc0] sm:$0xff] %v279
    %523 = vst [vmem:[#allocation4 + $0xc8] sm:$0xff] %v281
    %524 = vst [vmem:[#allocation4 + $0xd0] sm:$0xff] %v440
    %525 = vst [vmem:[#allocation4 + $0xd8] sm:$0xff] %v442
    %526 = vst [vmem:[#allocation4 + $0xe0] sm:$0xff] %v285
    %527 = vst [vmem:[#allocation4 + $0xe8] sm:$0xff] %v287
    %528 = vst [vmem:[#allocation4 + $0xf0] sm:$0xff] %v446
    %529 = vst [vmem:[#allocation4 + $0xf8] sm:$0xff] %v448
    %530 = vst [vmem:[#allocation4 + $0x100] sm:$0xff] %v291
    %531 = vst [vmem:[#allocation4 + $0x108] sm:$0xff] %v293
    %532 = vst [vmem:[#allocation4 + $0x110] sm:$0xff] %v452
    %533 = vst [vmem:[#allocation4 + $0x118] sm:$0xff] %v454
    %534 = vst [vmem:[#allocation4 + $0x120] sm:$0xff] %v297
    %535 = vst [vmem:[#allocation4 + $0x128] sm:$0xff] %v299
    %536 = vst [vmem:[#allocation4 + $0x130] sm:$0xff] %v458
    %537 = vst [vmem:[#allocation4 + $0x138] sm:$0xff] %v460
    %538 = vst [vmem:[#allocation4 + $0x140] sm:$0xff] %v303
    %539 = vst [vmem:[#allocation4 + $0x148] sm:$0xff] %v305
    %540 = vst [vmem:[#allocation4 + $0x150] sm:$0xff] %v464
    %541 = vst [vmem:[#allocation4 + $0x158] sm:$0xff] %v466
    %542 = vst [vmem:[#allocation4 + $0x160] sm:$0xff] %v309
    %543 = vst [vmem:[#allocation4 + $0x168] sm:$0xff] %v311
    %544 = vst [vmem:[#allocation4 + $0x170] sm:$0xff] %v470
    %545 = vst [vmem:[#allocation4 + $0x178] sm:$0xff] %v472
    %546 = vst [vmem:[#allocation4 + $0x180] sm:$0xff] %v315
    %547 = vst [vmem:[#allocation4 + $0x188] sm:$0xff] %v317
    %548 = vst [vmem:[#allocation4 + $0x190] sm:$0xff] %v476
    %549 = vst [vmem:[#allocation4 + $0x198] sm:$0xff] %v478
    %550 = vst [vmem:[#allocation4 + $0x1a0] sm:$0xff] %v321
    %551 = vst [vmem:[#allocation4 + $0x1a8] sm:$0xff] %v323
    %552 = vst [vmem:[#allocation4 + $0x1b0] sm:$0xff] %v482
    %553 = vst [vmem:[#allocation4 + $0x1b8] sm:$0xff] %v484
    %554 = vst [vmem:[#allocation4 + $0x1c0] sm:$0xff] %v327
    %555 = vst [vmem:[#allocation4 + $0x1c8] sm:$0xff] %v329
    %556 = vst [vmem:[#allocation4 + $0x1d0] sm:$0xff] %v488
    %557 = vst [vmem:[#allocation4 + $0x1d8] sm:$0xff] %v490
    %558 = vst [vmem:[#allocation4 + $0x1e0] sm:$0xff] %v333
    %559 = vst [vmem:[#allocation4 + $0x1e8] sm:$0xff] %v335
    %560 = vst [vmem:[#allocation4 + $0x1f0] sm:$0xff] %v494
    %561 = vst [vmem:[#allocation4 + $0x1f8] sm:$0xff] %v496
    %v562 = vld [vmem:[#allocation2] sm:$0xff]
    %v563 = vld [vmem:[#allocation2 + $0x8] sm:$0xff]
    %v564 = vld [vmem:[#allocation3] sm:$0xff]
    %v565 = vld [vmem:[#allocation3 + $0x8] sm:$0xff]
    %s566 = smul.u32 0, 4
    %s567 = smul.addr %s566, 8
    %s568 = scalar_lea.vmem [#allocation4], %s567
    %v569 = vld [vmem:[%s568] sm:$0xff]
    %v570 = vld [vmem:[%s568 + $0x8] sm:$0xff]
    %v571 = vld [vmem:[%s568 + $0x10] sm:$0xff]
    %v572 = vld [vmem:[%s568 + $0x18] sm:$0xff]
    %v573 = vld [vmem:[%s568 + $0x20] sm:$0xff]
    %v574 = vld [vmem:[%s568 + $0x28] sm:$0xff]
    %v575 = vld [vmem:[%s568 + $0x30] sm:$0xff]
    %v576 = vld [vmem:[%s568 + $0x38] sm:$0xff]
    %v577 = vld [vmem:[#allocation5] sm:$0xff]
    %v578 = vld [vmem:[#allocation5 + $0x8] sm:$0xff]
    %v579 = vld [vmem:[#allocation5 + $0x10] sm:$0xff]
    %v580 = vld [vmem:[#allocation5 + $0x18] sm:$0xff]
    %v581 = vld [vmem:[#allocation5 + $0x20] sm:$0xff]
    %v582 = vld [vmem:[#allocation5 + $0x28] sm:$0xff]
    %v583 = vld [vmem:[#allocation5 + $0x30] sm:$0xff]
    %v584 = vld [vmem:[#allocation5 + $0x38] sm:$0xff]
    %v585 = vld [vmem:[#allocation5 + $0x40] sm:$0xff]
    %v586 = vld [vmem:[#allocation5 + $0x48] sm:$0xff]
    %v587 = vld [vmem:[#allocation5 + $0x50] sm:$0xff]
    %v588 = vld [vmem:[#allocation5 + $0x58] sm:$0xff]
    %v589 = vld [vmem:[#allocation5 + $0x60] sm:$0xff]
    %v590 = vld [vmem:[#allocation5 + $0x68] sm:$0xff]
    %v591 = vld [vmem:[#allocation5 + $0x70] sm:$0xff]
    %v592 = vld [vmem:[#allocation5 + $0x78] sm:$0xff]
    %v593 = vld [vmem:[#allocation5 + $0x80] sm:$0xff]
    %v594 = vld [vmem:[#allocation5 + $0x88] sm:$0xff]
    %v595 = vld [vmem:[#allocation5 + $0x90] sm:$0xff]
    %v596 = vld [vmem:[#allocation5 + $0x98] sm:$0xff]
    %v597 = vld [vmem:[#allocation5 + $0xa0] sm:$0xff]
    %v598 = vld [vmem:[#allocation5 + $0xa8] sm:$0xff]
    %v599 = vld [vmem:[#allocation5 + $0xb0] sm:$0xff]
    %v600 = vld [vmem:[#allocation5 + $0xb8] sm:$0xff]
    %v601 = vld [vmem:[#allocation5 + $0xc0] sm:$0xff]
    %v602 = vld [vmem:[#allocation5 + $0xc8] sm:$0xff]
    %v603 = vld [vmem:[#allocation5 + $0xd0] sm:$0xff]
    %v604 = vld [vmem:[#allocation5 + $0xd8] sm:$0xff]
    %v605 = vld [vmem:[#allocation5 + $0xe0] sm:$0xff]
    %v606 = vld [vmem:[#allocation5 + $0xe8] sm:$0xff]
    %v607 = vld [vmem:[#allocation5 + $0xf0] sm:$0xff]
    %v608 = vld [vmem:[#allocation5 + $0xf8] sm:$0xff]
    %v609 = vld [vmem:[#allocation5 + $0x100] sm:$0xff]
    %v610 = vld [vmem:[#allocation5 + $0x108] sm:$0xff]
    %v611 = vld [vmem:[#allocation5 + $0x110] sm:$0xff]
    %v612 = vld [vmem:[#allocation5 + $0x118] sm:$0xff]
    %v613 = vld [vmem:[#allocation5 + $0x120] sm:$0xff]
    %v614 = vld [vmem:[#allocation5 + $0x128] sm:$0xff]
    %v615 = vld [vmem:[#allocation5 + $0x130] sm:$0xff]
    %v616 = vld [vmem:[#allocation5 + $0x138] sm:$0xff]
    %v617 = vld [vmem:[#allocation5 + $0x140] sm:$0xff]
    %v618 = vld [vmem:[#allocation5 + $0x148] sm:$0xff]
    %v619 = vld [vmem:[#allocation5 + $0x150] sm:$0xff]
    %v620 = vld [vmem:[#allocation5 + $0x158] sm:$0xff]
    %v621 = vld [vmem:[#allocation5 + $0x160] sm:$0xff]
    %v622 = vld [vmem:[#allocation5 + $0x168] sm:$0xff]
    %v623 = vld [vmem:[#allocation5 + $0x170] sm:$0xff]
    %v624 = vld [vmem:[#allocation5 + $0x178] sm:$0xff]
    %v625 = vld [vmem:[#allocation5 + $0x180] sm:$0xff]
    %v626 = vld [vmem:[#allocation5 + $0x188] sm:$0xff]
    %v627 = vld [vmem:[#allocation5 + $0x190] sm:$0xff]
    %v628 = vld [vmem:[#allocation5 + $0x198] sm:$0xff]
    %v629 = vld [vmem:[#allocation5 + $0x1a0] sm:$0xff]
    %v630 = vld [vmem:[#allocation5 + $0x1a8] sm:$0xff]
    %v631 = vld [vmem:[#allocation5 + $0x1b0] sm:$0xff]
    %v632 = vld [vmem:[#allocation5 + $0x1b8] sm:$0xff]
    %v633 = vld [vmem:[#allocation5 + $0x1c0] sm:$0xff]
    %v634 = vld [vmem:[#allocation5 + $0x1c8] sm:$0xff]
    %v635 = vld [vmem:[#allocation5 + $0x1d0] sm:$0xff]
    %v636 = vld [vmem:[#allocation5 + $0x1d8] sm:$0xff]
    %v637 = vld [vmem:[#allocation5 + $0x1e0] sm:$0xff]
    %v638 = vld [vmem:[#allocation5 + $0x1e8] sm:$0xff]
    %v639 = vld [vmem:[#allocation5 + $0x1f0] sm:$0xff]
    %v640 = vld [vmem:[#allocation5 + $0x1f8] sm:$0xff]
    %641 = vmatprep.subr.mxu0 %v578
    %642 = vmatpush1.msra.mxu0 %v577
    %643 = vmatprep.subr.mxu0 %v582
    %644 = vmatpush1.msra.mxu0 %v581
    %645 = vmatprep.subr.mxu0 %v586
    %646 = vmatpush1.msra.mxu0 %v585
    %647 = vmatprep.subr.mxu0 %v590
    %648 = vmatpush1.msra.mxu0 %v589
    %649 = vmatprep.subr.mxu0 %v594
    %650 = vmatpush1.msra.mxu0 %v593
    %651 = vmatprep.subr.mxu0 %v598
    %652 = vmatpush1.msra.mxu0 %v597
    %653 = vmatprep.subr.mxu0 %v602
    %654 = vmatpush1.msra.mxu0 %v601
    %655 = vmatprep.subr.mxu0 %v606
    %656 = vmatpush1.msra.mxu0 %v605
    %657 = vmatprep.subr.mxu0 %v610
    %658 = vmatpush1.msra.mxu0 %v609
    %659 = vmatprep.subr.mxu0 %v614
    %660 = vmatpush1.msra.mxu0 %v613
    %661 = vmatprep.subr.mxu0 %v618
    %662 = vmatpush1.msra.mxu0 %v617
    %663 = vmatprep.subr.mxu0 %v622
    %664 = vmatpush1.msra.mxu0 %v621
    %665 = vmatprep.subr.mxu0 %v626
    %666 = vmatpush1.msra.mxu0 %v625
    %667 = vmatprep.subr.mxu0 %v630
    %668 = vmatpush1.msra.mxu0 %v629
    %669 = vmatprep.subr.mxu0 %v634
    %670 = vmatpush1.msra.mxu0 %v633
    %671 = vmatprep.subr.mxu0 %v638
    %672 = vmatpush1.msra.mxu0 %v637
    %673 = vmatprep.subr.mxu0 0.0
    %674 = vmatpush1.msra.mxu0 0.0
    %675 = vmatprep.subr.mxu0 0.0
    %676 = vmatpush1.msra.mxu0 0.0
    %677 = vmatprep.subr.mxu0 0.0
    %678 = vmatpush1.msra.mxu0 0.0
    %679 = vmatprep.subr.mxu0 0.0
    %680 = vmatpush1.msra.mxu0 0.0
    %681 = vmatprep.subr.mxu0 0.0
    %682 = vmatpush1.msra.mxu0 0.0
    %683 = vmatprep.subr.mxu0 0.0
    %684 = vmatpush1.msra.mxu0 0.0
    %685 = vmatprep.subr.mxu0 0.0
    %686 = vmatpush1.msra.mxu0 0.0
    %687 = vmatprep.subr.mxu0 0.0
    %688 = vmatpush1.msra.mxu0 0.0
    %689 = vmatprep.subr.mxu0 0.0
    %690 = vmatpush1.msra.mxu0 0.0
    %691 = vmatprep.subr.mxu0 0.0
    %692 = vmatpush1.msra.mxu0 0.0
    %693 = vmatprep.subr.mxu0 0.0
    %694 = vmatpush1.msra.mxu0 0.0
    %695 = vmatprep.subr.mxu0 0.0
    %696 = vmatpush1.msra.mxu0 0.0
    %697 = vmatprep.subr.mxu0 0.0
    %698 = vmatpush1.msra.mxu0 0.0
    %699 = vmatprep.subr.mxu0 0.0
    %700 = vmatpush1.msra.mxu0 0.0
    %701 = vmatprep.subr.mxu0 0.0
    %702 = vmatpush1.msra.mxu0 0.0
    %703 = vmatprep.subr.mxu0 0.0
    %704 = vmatpush1.msra.mxu0 0.0
    %705 = vmatprep.mubr.f32.mxu0 0.0
    %706 = vmatmul.mubr.f32.gmra.mrb[0].mxu0 %v562
    %v707 = vpop.f32.mrb[0].mxu0
    %v708 = vadd.f32 0.0, %v707
    %v709 = vpop.f32.mrb[0].mxu0
    %v710 = vadd.f32 0.0, %v709
    %711 = vmatprep.mubr.f32.mxu0 0.0
    %712 = vmatmul.mubr.f32.gmra.mrb[0].mxu0 %v563
    %v713 = vpop.f32.mrb[0].mxu0
    %v714 = vadd.f32 0.0, %v713
    %v715 = vpop.f32.mrb[0].mxu0
    %v716 = vadd.f32 0.0, %v715
    %717 = vdwg.mxu0
    %718 = vmatprep.subr.mxu0 %v580
    %719 = vmatpush1.msra.mxu0 %v579
    %720 = vmatprep.subr.mxu0 %v584
    %721 = vmatpush1.msra.mxu0 %v583
    %722 = vmatprep.subr.mxu0 %v588
    %723 = vmatpush1.msra.mxu0 %v587
    %724 = vmatprep.subr.mxu0 %v592
    %725 = vmatpush1.msra.mxu0 %v591
    %726 = vmatprep.subr.mxu0 %v596
    %727 = vmatpush1.msra.mxu0 %v595
    %728 = vmatprep.subr.mxu0 %v600
    %729 = vmatpush1.msra.mxu0 %v599
    %730 = vmatprep.subr.mxu0 %v604
    %731 = vmatpush1.msra.mxu0 %v603
    %732 = vmatprep.subr.mxu0 %v608
    %733 = vmatpush1.msra.mxu0 %v607
    %734 = vmatprep.subr.mxu0 %v612
    %735 = vmatpush1.msra.mxu0 %v611
    %736 = vmatprep.subr.mxu0 %v616
    %737 = vmatpush1.msra.mxu0 %v615
    %738 = vmatprep.subr.mxu0 %v620
    %739 = vmatpush1.msra.mxu0 %v619
    %740 = vmatprep.subr.mxu0 %v624
    %741 = vmatpush1.msra.mxu0 %v623
    %742 = vmatprep.subr.mxu0 %v628
    %743 = vmatpush1.msra.mxu0 %v627
    %744 = vmatprep.subr.mxu0 %v632
    %745 = vmatpush1.msra.mxu0 %v631
    %746 = vmatprep.subr.mxu0 %v636
    %747 = vmatpush1.msra.mxu0 %v635
    %748 = vmatprep.subr.mxu0 %v640
    %749 = vmatpush1.msra.mxu0 %v639
    %750 = vmatprep.subr.mxu0 0.0
    %751 = vmatpush1.msra.mxu0 0.0
    %752 = vmatprep.subr.mxu0 0.0
    %753 = vmatpush1.msra.mxu0 0.0
    %754 = vmatprep.subr.mxu0 0.0
    %755 = vmatpush1.msra.mxu0 0.0
    %756 = vmatprep.subr.mxu0 0.0
    %757 = vmatpush1.msra.mxu0 0.0
    %758 = vmatprep.subr.mxu0 0.0
    %759 = vmatpush1.msra.mxu0 0.0
    %760 = vmatprep.subr.mxu0 0.0
    %761 = vmatpush1.msra.mxu0 0.0
    %762 = vmatprep.subr.mxu0 0.0
    %763 = vmatpush1.msra.mxu0 0.0
    %764 = vmatprep.subr.mxu0 0.0
    %765 = vmatpush1.msra.mxu0 0.0
    %766 = vmatprep.subr.mxu0 0.0
    %767 = vmatpush1.msra.mxu0 0.0
    %768 = vmatprep.subr.mxu0 0.0
    %769 = vmatpush1.msra.mxu0 0.0
    %770 = vmatprep.subr.mxu0 0.0
    %771 = vmatpush1.msra.mxu0 0.0
    %772 = vmatprep.subr.mxu0 0.0
    %773 = vmatpush1.msra.mxu0 0.0
    %774 = vmatprep.subr.mxu0 0.0
    %775 = vmatpush1.msra.mxu0 0.0
    %776 = vmatprep.subr.mxu0 0.0
    %777 = vmatpush1.msra.mxu0 0.0
    %778 = vmatprep.subr.mxu0 0.0
    %779 = vmatpush1.msra.mxu0 0.0
    %780 = vmatprep.subr.mxu0 0.0
    %781 = vmatpush1.msra.mxu0 0.0
    %782 = vmatprep.mubr.f32.mxu0 0.0
    %783 = vmatmul.mubr.f32.gmra.mrb[0].mxu0 %v562
    %v784 = vpop.f32.mrb[0].mxu0
    %v785 = vadd.f32 0.0, %v784
    %v786 = vpop.f32.mrb[0].mxu0
    %v787 = vadd.f32 0.0, %v786
    %788 = vmatprep.mubr.f32.mxu0 0.0
    %789 = vmatmul.mubr.f32.gmra.mrb[0].mxu0 %v563
    %v790 = vpop.f32.mrb[0].mxu0
    %v791 = vadd.f32 0.0, %v790
    %v792 = vpop.f32.mrb[0].mxu0
    %v793 = vadd.f32 0.0, %v792
    %794 = vdwg.mxu0
    %v795 = vadd.f32 %v569, %v708
    %v796 = vadd.f32 %v570, %v710
    %v797 = vadd.f32 %v571, %v785
    %v798 = vadd.f32 %v572, %v787
    %v799 = vadd.f32 %v573, %v714
    %v800 = vadd.f32 %v574, %v716
    %v801 = vadd.f32 %v575, %v791
    %v802 = vadd.f32 %v576, %v793
    %v803 = vxor.u32 %v795, 2147483648
    %v804 = vxor.u32 %v796, 2147483648
    %v805 = vxor.u32 %v797, 2147483648
    %v806 = vxor.u32 %v799, 2147483648
    %v807 = vxor.u32 %v800, 2147483648
    %v808 = vxor.u32 %v801, 2147483648
    %v809 = vmul.f32 %v803, 1.442695
    %v810 = vpow.pop %v809
    %v811 = vmul.f32 %v804, 1.442695
    %v812 = vpow.pop %v811
    %v813 = vmul.f32 %v805, 1.442695
    %v814 = vpow.pop %v813
    %v815 = vmul.f32 %v806, 1.442695
    %v816 = vpow.pop %v815
    %v817 = vmul.f32 %v807, 1.442695
    %v818 = vpow.pop %v817
    %v819 = vmul.f32 %v808, 1.442695
    %v820 = vpow.pop %v819
    %v821 = vadd.f32 %v810, 1.0
    %v822 = vadd.f32 %v812, 1.0
    %v823 = vadd.f32 %v814, 1.0
    %v824 = vadd.f32 %v816, 1.0
    %v825 = vadd.f32 %v818, 1.0
    %v826 = vadd.f32 %v820, 1.0
    %v827 = vrcp.pop %v821
    %v828 = vmul.f32 1.0, %v827
    %v829 = vrcp.pop %v822
    %v830 = vmul.f32 1.0, %v829
    %v831 = vrcp.pop %v823
    %v832 = vmul.f32 1.0, %v831
    %v833 = vrcp.pop %v824
    %v834 = vmul.f32 1.0, %v833
    %v835 = vrcp.pop %v825
    %v836 = vmul.f32 1.0, %v835
    %v837 = vrcp.pop %v826
    %v838 = vmul.f32 1.0, %v837
    %v839 = vtanh.pop %v798
    %v840 = vtanh.pop %v802
    %v841 = vmul.f32 %v830, %v564
    %v842 = vmul.f32 %v836, %v565
    %v843 = vmul.f32 %v828, %v839
    %v844 = vmul.f32 %v834, %v840
    %v845 = vadd.f32 %v841, %v843
    %v846 = vadd.f32 %v842, %v844
    %v847 = vtanh.pop %v845
    %v848 = vtanh.pop %v846
    %v849 = vmul.f32 %v832, %v847
    %v850 = vmul.f32 %v838, %v848
    %s851 = smul.u32 2, 4
    %s852 = smul.addr %s851, 8
    %s853 = scalar_lea.vmem [#allocation4], %s852
    %v854 = vld [vmem:[%s853] sm:$0xff]
    %v855 = vld [vmem:[%s853 + $0x8] sm:$0xff]
    %v856 = vld [vmem:[%s853 + $0x10] sm:$0xff]
    %v857 = vld [vmem:[%s853 + $0x18] sm:$0xff]
    %v858 = vld [vmem:[%s853 + $0x20] sm:$0xff]
    %v859 = vld [vmem:[%s853 + $0x28] sm:$0xff]
    %v860 = vld [vmem:[%s853 + $0x30] sm:$0xff]
    %v861 = vld [vmem:[%s853 + $0x38] sm:$0xff]
    %862 = vmatprep.subr.mxu0 %v578
    %863 = vmatpush1.msra.mxu0 %v577
    %864 = vmatprep.subr.mxu0 %v582
    %865 = vmatpush1.msra.mxu0 %v581
    %866 = vmatprep.subr.mxu0 %v586
    %867 = vmatpush1.msra.mxu0 %v585
    %868 = vmatprep.subr.mxu0 %v590
    %869 = vmatpush1.msra.mxu0 %v589
    %870 = vmatprep.subr.mxu0 %v594
    %871 = vmatpush1.msra.mxu0 %v593
    %872 = vmatprep.subr.mxu0 %v598
    %873 = vmatpush1.msra.mxu0 %v597
    %874 = vmatprep.subr.mxu0 %v602
    %875 = vmatpush1.msra.mxu0 %v601
    %876 = vmatprep.subr.mxu0 %v606
    %877 = vmatpush1.msra.mxu0 %v605
    %878 = vmatprep.subr.mxu0 %v610
    %879 = vmatpush1.msra.mxu0 %v609
    %880 = vmatprep.subr.mxu0 %v614
    %881 = vmatpush1.msra.mxu0 %v613
    %882 = vmatprep.subr.mxu0 %v618
    %883 = vmatpush1.msra.mxu0 %v617
    %884 = vmatprep.subr.mxu0 %v622
    %885 = vmatpush1.msra.mxu0 %v621
    %886 = vmatprep.subr.mxu0 %v626
    %887 = vmatpush1.msra.mxu0 %v625
    %888 = vmatprep.subr.mxu0 %v630
    %889 = vmatpush1.msra.mxu0 %v629
    %890 = vmatprep.subr.mxu0 %v634
    %891 = vmatpush1.msra.mxu0 %v633
    %892 = vmatprep.subr.mxu0 %v638
    %893 = vmatpush1.msra.mxu0 %v637
    %894 = vmatprep.subr.mxu0 0.0
    %895 = vmatpush1.msra.mxu0 0.0
    %896 = vmatprep.subr.mxu0 0.0
    %897 = vmatpush1.msra.mxu0 0.0
    %898 = vmatprep.subr.mxu0 0.0
    %899 = vmatpush1.msra.mxu0 0.0
    %900 = vmatprep.subr.mxu0 0.0
    %901 = vmatpush1.msra.mxu0 0.0
    %902 = vmatprep.subr.mxu0 0.0
    %903 = vmatpush1.msra.mxu0 0.0
    %904 = vmatprep.subr.mxu0 0.0
    %905 = vmatpush1.msra.mxu0 0.0
    %906 = vmatprep.subr.mxu0 0.0
    %907 = vmatpush1.msra.mxu0 0.0
    %908 = vmatprep.subr.mxu0 0.0
    %909 = vmatpush1.msra.mxu0 0.0
    %910 = vmatprep.subr.mxu0 0.0
    %911 = vmatpush1.msra.mxu0 0.0
    %912 = vmatprep.subr.mxu0 0.0
    %913 = vmatpush1.msra.mxu0 0.0
    %914 = vmatprep.subr.mxu0 0.0
    %915 = vmatpush1.msra.mxu0 0.0
    %916 = vmatprep.subr.mxu0 0.0
    %917 = vmatpush1.msra.mxu0 0.0
    %918 = vmatprep.subr.mxu0 0.0
    %919 = vmatpush1.msra.mxu0 0.0
    %920 = vmatprep.subr.mxu0 0.0
    %921 = vmatpush1.msra.mxu0 0.0
    %922 = vmatprep.subr.mxu0 0.0
    %923 = vmatpush1.msra.mxu0 0.0
    %924 = vmatprep.subr.mxu0 0.0
    %925 = vmatpush1.msra.mxu0 0.0
    %926 = vmatprep.mubr.f32.mxu0 0.0
    %927 = vmatmul.mubr.f32.gmra.mrb[0].mxu0 %v849
    %v928 = vpop.f32.mrb[0].mxu0
    %v929 = vadd.f32 0.0, %v928
    %v930 = vpop.f32.mrb[0].mxu0
    %v931 = vadd.f32 0.0, %v930
    %932 = vmatprep.mubr.f32.mxu0 0.0
    %933 = vmatmul.mubr.f32.gmra.mrb[0].mxu0 %v850
    %v934 = vpop.f32.mrb[0].mxu0
    %v935 = vadd.f32 0.0, %v934
    %v936 = vpop.f32.mrb[0].mxu0
    %v937 = vadd.f32 0.0, %v936
    %938 = vdwg.mxu0
    %939 = vmatprep.subr.mxu0 %v580
    %940 = vmatpush1.msra.mxu0 %v579
    %941 = vmatprep.subr.mxu0 %v584
    %942 = vmatpush1.msra.mxu0 %v583
    %943 = vmatprep.subr.mxu0 %v588
    %944 = vmatpush1.msra.mxu0 %v587
    %945 = vmatprep.subr.mxu0 %v592
    %946 = vmatpush1.msra.mxu0 %v591
    %947 = vmatprep.subr.mxu0 %v596
    %948 = vmatpush1.msra.mxu0 %v595
    %949 = vmatprep.subr.mxu0 %v600
    %950 = vmatpush1.msra.mxu0 %v599
    %951 = vmatprep.subr.mxu0 %v604
    %952 = vmatpush1.msra.mxu0 %v603
    %953 = vmatprep.subr.mxu0 %v608
    %954 = vmatpush1.msra.mxu0 %v607
    %955 = vmatprep.subr.mxu0 %v612
    %956 = vmatpush1.msra.mxu0 %v611
    %957 = vmatprep.subr.mxu0 %v616
    %958 = vmatpush1.msra.mxu0 %v615
    %959 = vmatprep.subr.mxu0 %v620
    %960 = vmatpush1.msra.mxu0 %v619
    %961 = vmatprep.subr.mxu0 %v624
    %962 = vmatpush1.msra.mxu0 %v623
    %963 = vmatprep.subr.mxu0 %v628
    %964 = vmatpush1.msra.mxu0 %v627
    %965 = vmatprep.subr.mxu0 %v632
    %966 = vmatpush1.msra.mxu0 %v631
    %967 = vmatprep.subr.mxu0 %v636
    %968 = vmatpush1.msra.mxu0 %v635
    %969 = vmatprep.subr.mxu0 %v640
    %970 = vmatpush1.msra.mxu0 %v639
    %971 = vmatprep.subr.mxu0 0.0
    %972 = vmatpush1.msra.mxu0 0.0
    %973 = vmatprep.subr.mxu0 0.0
    %974 = vmatpush1.msra.mxu0 0.0
    %975 = vmatprep.subr.mxu0 0.0
    %976 = vmatpush1.msra.mxu0 0.0
    %977 = vmatprep.subr.mxu0 0.0
    %978 = vmatpush1.msra.mxu0 0.0
    %979 = vmatprep.subr.mxu0 0.0
    %980 = vmatpush1.msra.mxu0 0.0
    %981 = vmatprep.subr.mxu0 0.0
    %982 = vmatpush1.msra.mxu0 0.0
    %983 = vmatprep.subr.mxu0 0.0
    %984 = vmatpush1.msra.mxu0 0.0
    %985 = vmatprep.subr.mxu0 0.0
    %986 = vmatpush1.msra.mxu0 0.0
    %987 = vmatprep.subr.mxu0 0.0
    %988 = vmatpush1.msra.mxu0 0.0
    %989 = vmatprep.subr.mxu0 0.0
    %990 = vmatpush1.msra.mxu0 0.0
    %991 = vmatprep.subr.mxu0 0.0
    %992 = vmatpush1.msra.mxu0 0.0
    %993 = vmatprep.subr.mxu0 0.0
    %994 = vmatpush1.msra.mxu0 0.0
    %995 = vmatprep.subr.mxu0 0.0
    %996 = vmatpush1.msra.mxu0 0.0
    %997 = vmatprep.subr.mxu0 0.0
    %998 = vmatpush1.msra.mxu0 0.0
    %999 = vmatprep.subr.mxu0 0.0
    %1000 = vmatpush1.msra.mxu0 0.0
    %1001 = vmatprep.subr.mxu0 0.0
    %1002 = vmatpush1.msra.mxu0 0.0
    %1003 = vmatprep.mubr.f32.mxu0 0.0
    %1004 = vmatmul.mubr.f32.gmra.mrb[0].mxu0 %v849
    %v1005 = vpop.f32.mrb[0].mxu0
    %v1006 = vadd.f32 0.0, %v1005
    %v1007 = vpop.f32.mrb[0].mxu0
    %v1008 = vadd.f32 0.0, %v1007
    %1009 = vmatprep.mubr.f32.mxu0 0.0
    %1010 = vmatmul.mubr.f32.gmra.mrb[0].mxu0 %v850
    %v1011 = vpop.f32.mrb[0].mxu0
    %v1012 = vadd.f32 0.0, %v1011
    %v1013 = vpop.f32.mrb[0].mxu0
    %v1014 = vadd.f32 0.0, %v1013
    %1015 = vdwg.mxu0
    %v1016 = vadd.f32 %v854, %v929
    %v1017 = vadd.f32 %v855, %v931
    %v1018 = vadd.f32 %v856, %v1006
    %v1019 = vadd.f32 %v857, %v1008
    %v1020 = vadd.f32 %v858, %v935
    %v1021 = vadd.f32 %v859, %v937
    %v1022 = vadd.f32 %v860, %v1012
    %v1023 = vadd.f32 %v861, %v1014
    %v1024 = vxor.u32 %v1016, 2147483648
    %v1025 = vxor.u32 %v1017, 2147483648
    %v1026 = vxor.u32 %v1018, 2147483648
    %v1027 = vxor.u32 %v1020, 2147483648
    %v1028 = vxor.u32 %v1021, 2147483648
    %v1029 = vxor.u32 %v1022, 2147483648
    %v1030 = vmul.f32 %v1024, 1.442695
    %v1031 = vpow.pop %v1030
    %v1032 = vmul.f32 %v1025, 1.442695
    %v1033 = vpow.pop %v1032
    %v1034 = vmul.f32 %v1026, 1.442695
    %v1035 = vpow.pop %v1034
    %v1036 = vmul.f32 %v1027, 1.442695
    %v1037 = vpow.pop %v1036
    %v1038 = vmul.f32 %v1028, 1.442695
    %v1039 = vpow.pop %v1038
    %v1040 = vmul.f32 %v1029, 1.442695
    %v1041 = vpow.pop %v1040
    %v1042 = vadd.f32 %v1031, 1.0
    %v1043 = vadd.f32 %v1033, 1.0
    %v1044 = vadd.f32 %v1035, 1.0
    %v1045 = vadd.f32 %v1037, 1.0
    %v1046 = vadd.f32 %v1039, 1.0
    %v1047 = vadd.f32 %v1041, 1.0
    %v1048 = vrcp.pop %v1042
    %v1049 = vmul.f32 1.0, %v1048
    %v1050 = vrcp.pop %v1043
    %v1051 = vmul.f32 1.0, %v1050
    %v1052 = vrcp.pop %v1044
    %v1053 = vmul.f32 1.0, %v1052
    %v1054 = vrcp.pop %v1045
    %v1055 = vmul.f32 1.0, %v1054
    %v1056 = vrcp.pop %v1046
    %v1057 = vmul.f32 1.0, %v1056
    %v1058 = vrcp.pop %v1047
    %v1059 = vmul.f32 1.0, %v1058
    %v1060 = vtanh.pop %v1019
    %v1061 = vtanh.pop %v1023
    %v1062 = vmul.f32 %v1051, %v845
    %v1063 = vmul.f32 %v1057, %v846
    %v1064 = vmul.f32 %v1049, %v1060
    %v1065 = vmul.f32 %v1055, %v1061
    %v1066 = vadd.f32 %v1062, %v1064
    %v1067 = vadd.f32 %v1063, %v1065
    %v1068 = vtanh.pop %v1066
    %v1069 = vtanh.pop %v1067
    %v1070 = vmul.f32 %v1053, %v1068
    %v1071 = vmul.f32 %v1059, %v1069
    %s1072 = smul.u32 4, 4
    %s1073 = smul.addr %s1072, 8
    %s1074 = scalar_lea.vmem [#allocation4], %s1073
    %v1075 = vld [vmem:[%s1074] sm:$0xff]
    %v1076 = vld [vmem:[%s1074 + $0x8] sm:$0xff]
    %v1077 = vld [vmem:[%s1074 + $0x10] sm:$0xff]
    %v1078 = vld [vmem:[%s1074 + $0x18] sm:$0xff]
    %v1079 = vld [vmem:[%s1074 + $0x20] sm:$0xff]
    %v1080 = vld [vmem:[%s1074 + $0x28] sm:$0xff]
    %v1081 = vld [vmem:[%s1074 + $0x30] sm:$0xff]
    %v1082 = vld [vmem:[%s1074 + $0x38] sm:$0xff]
    %1083 = vmatprep.subr.mxu0 %v578
    %1084 = vmatpush1.msra.mxu0 %v577
    %1085 = vmatprep.subr.mxu0 %v582
    %1086 = vmatpush1.msra.mxu0 %v581
    %1087 = vmatprep.subr.mxu0 %v586
    %1088 = vmatpush1.msra.mxu0 %v585
    %1089 = vmatprep.subr.mxu0 %v590
    %1090 = vmatpush1.msra.mxu0 %v589
    %1091 = vmatprep.subr.mxu0 %v594
    %1092 = vmatpush1.msra.mxu0 %v593
    %1093 = vmatprep.subr.mxu0 %v598
    %1094 = vmatpush1.msra.mxu0 %v597
    %1095 = vmatprep.subr.mxu0 %v602
    %1096 = vmatpush1.msra.mxu0 %v601
    %1097 = vmatprep.subr.mxu0 %v606
    %1098 = vmatpush1.msra.mxu0 %v605
    %1099 = vmatprep.subr.mxu0 %v610
    %1100 = vmatpush1.msra.mxu0 %v609
    %1101 = vmatprep.subr.mxu0 %v614
    %1102 = vmatpush1.msra.mxu0 %v613
    %1103 = vmatprep.subr.mxu0 %v618
    %1104 = vmatpush1.msra.mxu0 %v617
    %1105 = vmatprep.subr.mxu0 %v622
    %1106 = vmatpush1.msra.mxu0 %v621
    %1107 = vmatprep.subr.mxu0 %v626
    %1108 = vmatpush1.msra.mxu0 %v625
    %1109 = vmatprep.subr.mxu0 %v630
    %1110 = vmatpush1.msra.mxu0 %v629
    %1111 = vmatprep.subr.mxu0 %v634
    %1112 = vmatpush1.msra.mxu0 %v633
    %1113 = vmatprep.subr.mxu0 %v638
    %1114 = vmatpush1.msra.mxu0 %v637
    %1115 = vmatprep.subr.mxu0 0.0
    %1116 = vmatpush1.msra.mxu0 0.0
    %1117 = vmatprep.subr.mxu0 0.0
    %1118 = vmatpush1.msra.mxu0 0.0
    %1119 = vmatprep.subr.mxu0 0.0
    %1120 = vmatpush1.msra.mxu0 0.0
    %1121 = vmatprep.subr.mxu0 0.0
    %1122 = vmatpush1.msra.mxu0 0.0
    %1123 = vmatprep.subr.mxu0 0.0
    %1124 = vmatpush1.msra.mxu0 0.0
    %1125 = vmatprep.subr.mxu0 0.0
    %1126 = vmatpush1.msra.mxu0 0.0
    %1127 = vmatprep.subr.mxu0 0.0
    %1128 = vmatpush1.msra.mxu0 0.0
    %1129 = vmatprep.subr.mxu0 0.0
    %1130 = vmatpush1.msra.mxu0 0.0
    %1131 = vmatprep.subr.mxu0 0.0
    %1132 = vmatpush1.msra.mxu0 0.0
    %1133 = vmatprep.subr.mxu0 0.0
    %1134 = vmatpush1.msra.mxu0 0.0
    %1135 = vmatprep.subr.mxu0 0.0
    %1136 = vmatpush1.msra.mxu0 0.0
    %1137 = vmatprep.subr.mxu0 0.0
    %1138 = vmatpush1.msra.mxu0 0.0
    %1139 = vmatprep.subr.mxu0 0.0
    %1140 = vmatpush1.msra.mxu0 0.0
    %1141 = vmatprep.subr.mxu0 0.0
    %1142 = vmatpush1.msra.mxu0 0.0
    %1143 = vmatprep.subr.mxu0 0.0
    %1144 = vmatpush1.msra.mxu0 0.0
    %1145 = vmatprep.subr.mxu0 0.0
    %1146 = vmatpush1.msra.mxu0 0.0
    %1147 = vmatprep.mubr.f32.mxu0 0.0
    %1148 = vmatmul.mubr.f32.gmra.mrb[0].mxu0 %v1070
    %v1149 = vpop.f32.mrb[0].mxu0
    %v1150 = vadd.f32 0.0, %v1149
    %v1151 = vpop.f32.mrb[0].mxu0
    %v1152 = vadd.f32 0.0, %v1151
    %1153 = vmatprep.mubr.f32.mxu0 0.0
    %1154 = vmatmul.mubr.f32.gmra.mrb[0].mxu0 %v1071
    %v1155 = vpop.f32.mrb[0].mxu0
    %v1156 = vadd.f32 0.0, %v1155
    %v1157 = vpop.f32.mrb[0].mxu0
    %v1158 = vadd.f32 0.0, %v1157
    %1159 = vdwg.mxu0
    %1160 = vmatprep.subr.mxu0 %v580
    %1161 = vmatpush1.msra.mxu0 %v579
    %1162 = vmatprep.subr.mxu0 %v584
    %1163 = vmatpush1.msra.mxu0 %v583
    %1164 = vmatprep.subr.mxu0 %v588
    %1165 = vmatpush1.msra.mxu0 %v587
    %1166 = vmatprep.subr.mxu0 %v592
    %1167 = vmatpush1.msra.mxu0 %v591
    %1168 = vmatprep.subr.mxu0 %v596
    %1169 = vmatpush1.msra.mxu0 %v595
    %1170 = vmatprep.subr.mxu0 %v600
    %1171 = vmatpush1.msra.mxu0 %v599
    %1172 = vmatprep.subr.mxu0 %v604
    %1173 = vmatpush1.msra.mxu0 %v603
    %1174 = vmatprep.subr.mxu0 %v608
    %1175 = vmatpush1.msra.mxu0 %v607
    %1176 = vmatprep.subr.mxu0 %v612
    %1177 = vmatpush1.msra.mxu0 %v611
    %1178 = vmatprep.subr.mxu0 %v616
    %1179 = vmatpush1.msra.mxu0 %v615
    %1180 = vmatprep.subr.mxu0 %v620
    %1181 = vmatpush1.msra.mxu0 %v619
    %1182 = vmatprep.subr.mxu0 %v624
    %1183 = vmatpush1.msra.mxu0 %v623
    %1184 = vmatprep.subr.mxu0 %v628
    %1185 = vmatpush1.msra.mxu0 %v627
    %1186 = vmatprep.subr.mxu0 %v632
    %1187 = vmatpush1.msra.mxu0 %v631
    %1188 = vmatprep.subr.mxu0 %v636
    %1189 = vmatpush1.msra.mxu0 %v635
    %1190 = vmatprep.subr.mxu0 %v640
    %1191 = vmatpush1.msra.mxu0 %v639
    %1192 = vmatprep.subr.mxu0 0.0
    %1193 = vmatpush1.msra.mxu0 0.0
    %1194 = vmatprep.subr.mxu0 0.0
    %1195 = vmatpush1.msra.mxu0 0.0
    %1196 = vmatprep.subr.mxu0 0.0
    %1197 = vmatpush1.msra.mxu0 0.0
    %1198 = vmatprep.subr.mxu0 0.0
    %1199 = vmatpush1.msra.mxu0 0.0
    %1200 = vmatprep.subr.mxu0 0.0
    %1201 = vmatpush1.msra.mxu0 0.0
    %1202 = vmatprep.subr.mxu0 0.0
    %1203 = vmatpush1.msra.mxu0 0.0
    %1204 = vmatprep.subr.mxu0 0.0
    %1205 = vmatpush1.msra.mxu0 0.0
    %1206 = vmatprep.subr.mxu0 0.0
    %1207 = vmatpush1.msra.mxu0 0.0
    %1208 = vmatprep.subr.mxu0 0.0
    %1209 = vmatpush1.msra.mxu0 0.0
    %1210 = vmatprep.subr.mxu0 0.0
    %1211 = vmatpush1.msra.mxu0 0.0
    %1212 = vmatprep.subr.mxu0 0.0
    %1213 = vmatpush1.msra.mxu0 0.0
    %1214 = vmatprep.subr.mxu0 0.0
    %1215 = vmatpush1.msra.mxu0 0.0
    %1216 = vmatprep.subr.mxu0 0.0
    %1217 = vmatpush1.msra.mxu0 0.0
    %1218 = vmatprep.subr.mxu0 0.0
    %1219 = vmatpush1.msra.mxu0 0.0
    %1220 = vmatprep.subr.mxu0 0.0
    %1221 = vmatpush1.msra.mxu0 0.0
    %1222 = vmatprep.subr.mxu0 0.0
    %1223 = vmatpush1.msra.mxu0 0.0
    %1224 = vmatprep.mubr.f32.mxu0 0.0
    %1225 = vmatmul.mubr.f32.gmra.mrb[0].mxu0 %v1070
    %v1226 = vpop.f32.mrb[0].mxu0
    %v1227 = vadd.f32 0.0, %v1226
    %v1228 = vpop.f32.mrb[0].mxu0
    %v1229 = vadd.f32 0.0, %v1228
    %1230 = vmatprep.mubr.f32.mxu0 0.0
    %1231 = vmatmul.mubr.f32.gmra.mrb[0].mxu0 %v1071
    %v1232 = vpop.f32.mrb[0].mxu0
    %v1233 = vadd.f32 0.0, %v1232
    %v1234 = vpop.f32.mrb[0].mxu0
    %v1235 = vadd.f32 0.0, %v1234
    %1236 = vdwg.mxu0
    %v1237 = vadd.f32 %v1075, %v1150
    %v1238 = vadd.f32 %v1076, %v1152
    %v1239 = vadd.f32 %v1077, %v1227
    %v1240 = vadd.f32 %v1078, %v1229
    %v1241 = vadd.f32 %v1079, %v1156
    %v1242 = vadd.f32 %v1080, %v1158
    %v1243 = vadd.f32 %v1081, %v1233
    %v1244 = vadd.f32 %v1082, %v1235
    %v1245 = vxor.u32 %v1237, 2147483648
    %v1246 = vxor.u32 %v1238, 2147483648
    %v1247 = vxor.u32 %v1239, 2147483648
    %v1248 = vxor.u32 %v1241, 2147483648
    %v1249 = vxor.u32 %v1242, 2147483648
    %v1250 = vxor.u32 %v1243, 2147483648
    %v1251 = vmul.f32 %v1245, 1.442695
    %v1252 = vpow.pop %v1251
    %v1253 = vmul.f32 %v1246, 1.442695
    %v1254 = vpow.pop %v1253
    %v1255 = vmul.f32 %v1247, 1.442695
    %v1256 = vpow.pop %v1255
    %v1257 = vmul.f32 %v1248, 1.442695
    %v1258 = vpow.pop %v1257
    %v1259 = vmul.f32 %v1249, 1.442695
    %v1260 = vpow.pop %v1259
    %v1261 = vmul.f32 %v1250, 1.442695
    %v1262 = vpow.pop %v1261
    %v1263 = vadd.f32 %v1252, 1.0
    %v1264 = vadd.f32 %v1254, 1.0
    %v1265 = vadd.f32 %v1256, 1.0
    %v1266 = vadd.f32 %v1258, 1.0
    %v1267 = vadd.f32 %v1260, 1.0
    %v1268 = vadd.f32 %v1262, 1.0
    %v1269 = vrcp.pop %v1263
    %v1270 = vmul.f32 1.0, %v1269
    %v1271 = vrcp.pop %v1264
    %v1272 = vmul.f32 1.0, %v1271
    %v1273 = vrcp.pop %v1265
    %v1274 = vmul.f32 1.0, %v1273
    %v1275 = vrcp.pop %v1266
    %v1276 = vmul.f32 1.0, %v1275
    %v1277 = vrcp.pop %v1267
    %v1278 = vmul.f32 1.0, %v1277
    %v1279 = vrcp.pop %v1268
    %v1280 = vmul.f32 1.0, %v1279
    %v1281 = vtanh.pop %v1240
    %v1282 = vtanh.pop %v1244
    %v1283 = vmul.f32 %v1272, %v1066
    %v1284 = vmul.f32 %v1278, %v1067
    %v1285 = vmul.f32 %v1270, %v1281
    %v1286 = vmul.f32 %v1276, %v1282
    %v1287 = vadd.f32 %v1283, %v1285
    %v1288 = vadd.f32 %v1284, %v1286
    %v1289 = vtanh.pop %v1287
    %v1290 = vtanh.pop %v1288
    %v1291 = vmul.f32 %v1274, %v1289
    %v1292 = vmul.f32 %v1280, %v1290
    %s1293 = smul.u32 6, 4
    %s1294 = smul.addr %s1293, 8
    %s1295 = scalar_lea.vmem [#allocation4], %s1294
    %v1296 = vld [vmem:[%s1295] sm:$0xff]
    %v1297 = vld [vmem:[%s1295 + $0x8] sm:$0xff]
    %v1298 = vld [vmem:[%s1295 + $0x10] sm:$0xff]
    %v1299 = vld [vmem:[%s1295 + $0x18] sm:$0xff]
    %v1300 = vld [vmem:[%s1295 + $0x20] sm:$0xff]
    %v1301 = vld [vmem:[%s1295 + $0x28] sm:$0xff]
    %v1302 = vld [vmem:[%s1295 + $0x30] sm:$0xff]
    %v1303 = vld [vmem:[%s1295 + $0x38] sm:$0xff]
    %1304 = vmatprep.subr.mxu0 %v578
    %1305 = vmatpush1.msra.mxu0 %v577
    %1306 = vmatprep.subr.mxu0 %v582
    %1307 = vmatpush1.msra.mxu0 %v581
    %1308 = vmatprep.subr.mxu0 %v586
    %1309 = vmatpush1.msra.mxu0 %v585
    %1310 = vmatprep.subr.mxu0 %v590
    %1311 = vmatpush1.msra.mxu0 %v589
    %1312 = vmatprep.subr.mxu0 %v594
    %1313 = vmatpush1.msra.mxu0 %v593
    %1314 = vmatprep.subr.mxu0 %v598
    %1315 = vmatpush1.msra.mxu0 %v597
    %1316 = vmatprep.subr.mxu0 %v602
    %1317 = vmatpush1.msra.mxu0 %v601
    %1318 = vmatprep.subr.mxu0 %v606
    %1319 = vmatpush1.msra.mxu0 %v605
    %1320 = vmatprep.subr.mxu0 %v610
    %1321 = vmatpush1.msra.mxu0 %v609
    %1322 = vmatprep.subr.mxu0 %v614
    %1323 = vmatpush1.msra.mxu0 %v613
    %1324 = vmatprep.subr.mxu0 %v618
    %1325 = vmatpush1.msra.mxu0 %v617
    %1326 = vmatprep.subr.mxu0 %v622
    %1327 = vmatpush1.msra.mxu0 %v621
    %1328 = vmatprep.subr.mxu0 %v626
    %1329 = vmatpush1.msra.mxu0 %v625
    %1330 = vmatprep.subr.mxu0 %v630
    %1331 = vmatpush1.msra.mxu0 %v629
    %1332 = vmatprep.subr.mxu0 %v634
    %1333 = vmatpush1.msra.mxu0 %v633
    %1334 = vmatprep.subr.mxu0 %v638
    %1335 = vmatpush1.msra.mxu0 %v637
    %1336 = vmatprep.subr.mxu0 0.0
    %1337 = vmatpush1.msra.mxu0 0.0
    %1338 = vmatprep.subr.mxu0 0.0
    %1339 = vmatpush1.msra.mxu0 0.0
    %1340 = vmatprep.subr.mxu0 0.0
    %1341 = vmatpush1.msra.mxu0 0.0
    %1342 = vmatprep.subr.mxu0 0.0
    %1343 = vmatpush1.msra.mxu0 0.0
    %1344 = vmatprep.subr.mxu0 0.0
    %1345 = vmatpush1.msra.mxu0 0.0
    %1346 = vmatprep.subr.mxu0 0.0
    %1347 = vmatpush1.msra.mxu0 0.0
    %1348 = vmatprep.subr.mxu0 0.0
    %1349 = vmatpush1.msra.mxu0 0.0
    %1350 = vmatprep.subr.mxu0 0.0
    %1351 = vmatpush1.msra.mxu0 0.0
    %1352 = vmatprep.subr.mxu0 0.0
    %1353 = vmatpush1.msra.mxu0 0.0
    %1354 = vmatprep.subr.mxu0 0.0
    %1355 = vmatpush1.msra.mxu0 0.0
    %1356 = vmatprep.subr.mxu0 0.0
    %1357 = vmatpush1.msra.mxu0 0.0
    %1358 = vmatprep.subr.mxu0 0.0
    %1359 = vmatpush1.msra.mxu0 0.0
    %1360 = vmatprep.subr.mxu0 0.0
    %1361 = vmatpush1.msra.mxu0 0.0
    %1362 = vmatprep.subr.mxu0 0.0
    %1363 = vmatpush1.msra.mxu0 0.0
    %1364 = vmatprep.subr.mxu0 0.0
    %1365 = vmatpush1.msra.mxu0 0.0
    %1366 = vmatprep.subr.mxu0 0.0
    %1367 = vmatpush1.msra.mxu0 0.0
    %1368 = vmatprep.mubr.f32.mxu0 0.0
    %1369 = vmatmul.mubr.f32.gmra.mrb[0].mxu0 %v1291
    %v1370 = vpop.f32.mrb[0].mxu0
    %v1371 = vadd.f32 0.0, %v1370
    %v1372 = vpop.f32.mrb[0].mxu0
    %v1373 = vadd.f32 0.0, %v1372
    %1374 = vmatprep.mubr.f32.mxu0 0.0
    %1375 = vmatmul.mubr.f32.gmra.mrb[0].mxu0 %v1292
    %v1376 = vpop.f32.mrb[0].mxu0
    %v1377 = vadd.f32 0.0, %v1376
    %v1378 = vpop.f32.mrb[0].mxu0
    %v1379 = vadd.f32 0.0, %v1378
    %1380 = vdwg.mxu0
    %1381 = vmatprep.subr.mxu0 %v580
    %1382 = vmatpush1.msra.mxu0 %v579
    %1383 = vmatprep.subr.mxu0 %v584
    %1384 = vmatpush1.msra.mxu0 %v583
    %1385 = vmatprep.subr.mxu0 %v588
    %1386 = vmatpush1.msra.mxu0 %v587
    %1387 = vmatprep.subr.mxu0 %v592
    %1388 = vmatpush1.msra.mxu0 %v591
    %1389 = vmatprep.subr.mxu0 %v596
    %1390 = vmatpush1.msra.mxu0 %v595
    %1391 = vmatprep.subr.mxu0 %v600
    %1392 = vmatpush1.msra.mxu0 %v599
    %1393 = vmatprep.subr.mxu0 %v604
    %1394 = vmatpush1.msra.mxu0 %v603
    %1395 = vmatprep.subr.mxu0 %v608
    %1396 = vmatpush1.msra.mxu0 %v607
    %1397 = vmatprep.subr.mxu0 %v612
    %1398 = vmatpush1.msra.mxu0 %v611
    %1399 = vmatprep.subr.mxu0 %v616
    %1400 = vmatpush1.msra.mxu0 %v615
    %1401 = vmatprep.subr.mxu0 %v620
    %1402 = vmatpush1.msra.mxu0 %v619
    %1403 = vmatprep.subr.mxu0 %v624
    %1404 = vmatpush1.msra.mxu0 %v623
    %1405 = vmatprep.subr.mxu0 %v628
    %1406 = vmatpush1.msra.mxu0 %v627
    %1407 = vmatprep.subr.mxu0 %v632
    %1408 = vmatpush1.msra.mxu0 %v631
    %1409 = vmatprep.subr.mxu0 %v636
    %1410 = vmatpush1.msra.mxu0 %v635
    %1411 = vmatprep.subr.mxu0 %v640
    %1412 = vmatpush1.msra.mxu0 %v639
    %1413 = vmatprep.subr.mxu0 0.0
    %1414 = vmatpush1.msra.mxu0 0.0
    %1415 = vmatprep.subr.mxu0 0.0
    %1416 = vmatpush1.msra.mxu0 0.0
    %1417 = vmatprep.subr.mxu0 0.0
    %1418 = vmatpush1.msra.mxu0 0.0
    %1419 = vmatprep.subr.mxu0 0.0
    %1420 = vmatpush1.msra.mxu0 0.0
    %1421 = vmatprep.subr.mxu0 0.0
    %1422 = vmatpush1.msra.mxu0 0.0
    %1423 = vmatprep.subr.mxu0 0.0
    %1424 = vmatpush1.msra.mxu0 0.0
    %1425 = vmatprep.subr.mxu0 0.0
    %1426 = vmatpush1.msra.mxu0 0.0
    %1427 = vmatprep.subr.mxu0 0.0
    %1428 = vmatpush1.msra.mxu0 0.0
    %1429 = vmatprep.subr.mxu0 0.0
    %1430 = vmatpush1.msra.mxu0 0.0
    %1431 = vmatprep.subr.mxu0 0.0
    %1432 = vmatpush1.msra.mxu0 0.0
    %1433 = vmatprep.subr.mxu0 0.0
    %1434 = vmatpush1.msra.mxu0 0.0
    %1435 = vmatprep.subr.mxu0 0.0
    %1436 = vmatpush1.msra.mxu0 0.0
    %1437 = vmatprep.subr.mxu0 0.0
    %1438 = vmatpush1.msra.mxu0 0.0
    %1439 = vmatprep.subr.mxu0 0.0
    %1440 = vmatpush1.msra.mxu0 0.0
    %1441 = vmatprep.subr.mxu0 0.0
    %1442 = vmatpush1.msra.mxu0 0.0
    %1443 = vmatprep.subr.mxu0 0.0
    %1444 = vmatpush1.msra.mxu0 0.0
    %1445 = vmatprep.mubr.f32.mxu0 0.0
    %1446 = vmatmul.mubr.f32.gmra.mrb[0].mxu0 %v1291
    %v1447 = vpop.f32.mrb[0].mxu0
    %v1448 = vadd.f32 0.0, %v1447
    %v1449 = vpop.f32.mrb[0].mxu0
    %v1450 = vadd.f32 0.0, %v1449
    %1451 = vmatprep.mubr.f32.mxu0 0.0
    %1452 = vmatmul.mubr.f32.gmra.mrb[0].mxu0 %v1292
    %v1453 = vpop.f32.mrb[0].mxu0
    %v1454 = vadd.f32 0.0, %v1453
    %v1455 = vpop.f32.mrb[0].mxu0
    %v1456 = vadd.f32 0.0, %v1455
    %1457 = vdwg.mxu0
    %v1458 = vadd.f32 %v1296, %v1371
    %v1459 = vadd.f32 %v1297, %v1373
    %v1460 = vadd.f32 %v1298, %v1448
    %v1461 = vadd.f32 %v1299, %v1450
    %v1462 = vadd.f32 %v1300, %v1377
    %v1463 = vadd.f32 %v1301, %v1379
    %v1464 = vadd.f32 %v1302, %v1454
    %v1465 = vadd.f32 %v1303, %v1456
    %v1466 = vxor.u32 %v1458, 2147483648
    %v1467 = vxor.u32 %v1459, 2147483648
    %v1468 = vxor.u32 %v1460, 2147483648
    %v1469 = vxor.u32 %v1462, 2147483648
    %v1470 = vxor.u32 %v1463, 2147483648
    %v1471 = vxor.u32 %v1464, 2147483648
    %v1472 = vmul.f32 %v1466, 1.442695
    %v1473 = vpow.pop %v1472
    %v1474 = vmul.f32 %v1467, 1.442695
    %v1475 = vpow.pop %v1474
    %v1476 = vmul.f32 %v1468, 1.442695
    %v1477 = vpow.pop %v1476
    %v1478 = vmul.f32 %v1469, 1.442695
    %v1479 = vpow.pop %v1478
    %v1480 = vmul.f32 %v1470, 1.442695
    %v1481 = vpow.pop %v1480
    %v1482 = vmul.f32 %v1471, 1.442695
    %v1483 = vpow.pop %v1482
    %v1484 = vadd.f32 %v1473, 1.0
    %v1485 = vadd.f32 %v1475, 1.0
    %v1486 = vadd.f32 %v1477, 1.0
    %v1487 = vadd.f32 %v1479, 1.0
    %v1488 = vadd.f32 %v1481, 1.0
    %v1489 = vadd.f32 %v1483, 1.0
    %v1490 = vrcp.pop %v1484
    %v1491 = vmul.f32 1.0, %v1490
    %v1492 = vrcp.pop %v1485
    %v1493 = vmul.f32 1.0, %v1492
    %v1494 = vrcp.pop %v1486
    %v1495 = vmul.f32 1.0, %v1494
    %v1496 = vrcp.pop %v1487
    %v1497 = vmul.f32 1.0, %v1496
    %v1498 = vrcp.pop %v1488
    %v1499 = vmul.f32 1.0, %v1498
    %v1500 = vrcp.pop %v1489
    %v1501 = vmul.f32 1.0, %v1500
    %v1502 = vtanh.pop %v1461
    %v1503 = vtanh.pop %v1465
    %v1504 = vmul.f32 %v1493, %v1287
    %v1505 = vmul.f32 %v1499, %v1288
    %v1506 = vmul.f32 %v1491, %v1502
    %v1507 = vmul.f32 %v1497, %v1503
    %v1508 = vadd.f32 %v1504, %v1506
    %v1509 = vadd.f32 %v1505, %v1507
    %v1510 = vtanh.pop %v1508
    %v1511 = vtanh.pop %v1509
    %v1512 = vmul.f32 %v1495, %v1510
    %v1513 = vmul.f32 %v1501, %v1511
    %s1514 = smul.u32 8, 4
    %s1515 = smul.addr %s1514, 8
    %s1516 = scalar_lea.vmem [#allocation4], %s1515
    %v1517 = vld [vmem:[%s1516] sm:$0xff]
    %v1518 = vld [vmem:[%s1516 + $0x8] sm:$0xff]
    %v1519 = vld [vmem:[%s1516 + $0x10] sm:$0xff]
    %v1520 = vld [vmem:[%s1516 + $0x18] sm:$0xff]
    %v1521 = vld [vmem:[%s1516 + $0x20] sm:$0xff]
    %v1522 = vld [vmem:[%s1516 + $0x28] sm:$0xff]
    %v1523 = vld [vmem:[%s1516 + $0x30] sm:$0xff]
    %v1524 = vld [vmem:[%s1516 + $0x38] sm:$0xff]
    %1525 = vmatprep.subr.mxu0 %v578
    %1526 = vmatpush1.msra.mxu0 %v577
    %1527 = vmatprep.subr.mxu0 %v582
    %1528 = vmatpush1.msra.mxu0 %v581
    %1529 = vmatprep.subr.mxu0 %v586
    %1530 = vmatpush1.msra.mxu0 %v585
    %1531 = vmatprep.subr.mxu0 %v590
    %1532 = vmatpush1.msra.mxu0 %v589
    %1533 = vmatprep.subr.mxu0 %v594
    %1534 = vmatpush1.msra.mxu0 %v593
    %1535 = vmatprep.subr.mxu0 %v598
    %1536 = vmatpush1.msra.mxu0 %v597
    %1537 = vmatprep.subr.mxu0 %v602
    %1538 = vmatpush1.msra.mxu0 %v601
    %1539 = vmatprep.subr.mxu0 %v606
    %1540 = vmatpush1.msra.mxu0 %v605
    %1541 = vmatprep.subr.mxu0 %v610
    %1542 = vmatpush1.msra.mxu0 %v609
    %1543 = vmatprep.subr.mxu0 %v614
    %1544 = vmatpush1.msra.mxu0 %v613
    %1545 = vmatprep.subr.mxu0 %v618
    %1546 = vmatpush1.msra.mxu0 %v617
    %1547 = vmatprep.subr.mxu0 %v622
    %1548 = vmatpush1.msra.mxu0 %v621
    %1549 = vmatprep.subr.mxu0 %v626
    %1550 = vmatpush1.msra.mxu0 %v625
    %1551 = vmatprep.subr.mxu0 %v630
    %1552 = vmatpush1.msra.mxu0 %v629
    %1553 = vmatprep.subr.mxu0 %v634
    %1554 = vmatpush1.msra.mxu0 %v633
    %1555 = vmatprep.subr.mxu0 %v638
    %1556 = vmatpush1.msra.mxu0 %v637
    %1557 = vmatprep.subr.mxu0 0.0
    %1558 = vmatpush1.msra.mxu0 0.0
    %1559 = vmatprep.subr.mxu0 0.0
    %1560 = vmatpush1.msra.mxu0 0.0
    %1561 = vmatprep.subr.mxu0 0.0
    %1562 = vmatpush1.msra.mxu0 0.0
    %1563 = vmatprep.subr.mxu0 0.0
    %1564 = vmatpush1.msra.mxu0 0.0
    %1565 = vmatprep.subr.mxu0 0.0
    %1566 = vmatpush1.msra.mxu0 0.0
    %1567 = vmatprep.subr.mxu0 0.0
    %1568 = vmatpush1.msra.mxu0 0.0
    %1569 = vmatprep.subr.mxu0 0.0
    %1570 = vmatpush1.msra.mxu0 0.0
    %1571 = vmatprep.subr.mxu0 0.0
    %1572 = vmatpush1.msra.mxu0 0.0
    %1573 = vmatprep.subr.mxu0 0.0
    %1574 = vmatpush1.msra.mxu0 0.0
    %1575 = vmatprep.subr.mxu0 0.0
    %1576 = vmatpush1.msra.mxu0 0.0
    %1577 = vmatprep.subr.mxu0 0.0
    %1578 = vmatpush1.msra.mxu0 0.0
    %1579 = vmatprep.subr.mxu0 0.0
    %1580 = vmatpush1.msra.mxu0 0.0
    %1581 = vmatprep.subr.mxu0 0.0
    %1582 = vmatpush1.msra.mxu0 0.0
    %1583 = vmatprep.subr.mxu0 0.0
    %1584 = vmatpush1.msra.mxu0 0.0
    %1585 = vmatprep.subr.mxu0 0.0
    %1586 = vmatpush1.msra.mxu0 0.0
    %1587 = vmatprep.subr.mxu0 0.0
    %1588 = vmatpush1.msra.mxu0 0.0
    %1589 = vmatprep.mubr.f32.mxu0 0.0
    %1590 = vmatmul.mubr.f32.gmra.mrb[0].mxu0 %v1512
    %v1591 = vpop.f32.mrb[0].mxu0
    %v1592 = vadd.f32 0.0, %v1591
    %v1593 = vpop.f32.mrb[0].mxu0
    %v1594 = vadd.f32 0.0, %v1593
    %1595 = vmatprep.mubr.f32.mxu0 0.0
    %1596 = vmatmul.mubr.f32.gmra.mrb[0].mxu0 %v1513
    %v1597 = vpop.f32.mrb[0].mxu0
    %v1598 = vadd.f32 0.0, %v1597
    %v1599 = vpop.f32.mrb[0].mxu0
    %v1600 = vadd.f32 0.0, %v1599
    %1601 = vdwg.mxu0
    %1602 = vmatprep.subr.mxu0 %v580
    %1603 = vmatpush1.msra.mxu0 %v579
    %1604 = vmatprep.subr.mxu0 %v584
    %1605 = vmatpush1.msra.mxu0 %v583
    %1606 = vmatprep.subr.mxu0 %v588
    %1607 = vmatpush1.msra.mxu0 %v587
    %1608 = vmatprep.subr.mxu0 %v592
    %1609 = vmatpush1.msra.mxu0 %v591
    %1610 = vmatprep.subr.mxu0 %v596
    %1611 = vmatpush1.msra.mxu0 %v595
    %1612 = vmatprep.subr.mxu0 %v600
    %1613 = vmatpush1.msra.mxu0 %v599
    %1614 = vmatprep.subr.mxu0 %v604
    %1615 = vmatpush1.msra.mxu0 %v603
    %1616 = vmatprep.subr.mxu0 %v608
    %1617 = vmatpush1.msra.mxu0 %v607
    %1618 = vmatprep.subr.mxu0 %v612
    %1619 = vmatpush1.msra.mxu0 %v611
    %1620 = vmatprep.subr.mxu0 %v616
    %1621 = vmatpush1.msra.mxu0 %v615
    %1622 = vmatprep.subr.mxu0 %v620
    %1623 = vmatpush1.msra.mxu0 %v619
    %1624 = vmatprep.subr.mxu0 %v624
    %1625 = vmatpush1.msra.mxu0 %v623
    %1626 = vmatprep.subr.mxu0 %v628
    %1627 = vmatpush1.msra.mxu0 %v627
    %1628 = vmatprep.subr.mxu0 %v632
    %1629 = vmatpush1.msra.mxu0 %v631
    %1630 = vmatprep.subr.mxu0 %v636
    %1631 = vmatpush1.msra.mxu0 %v635
    %1632 = vmatprep.subr.mxu0 %v640
    %1633 = vmatpush1.msra.mxu0 %v639
    %1634 = vmatprep.subr.mxu0 0.0
    %1635 = vmatpush1.msra.mxu0 0.0
    %1636 = vmatprep.subr.mxu0 0.0
    %1637 = vmatpush1.msra.mxu0 0.0
    %1638 = vmatprep.subr.mxu0 0.0
    %1639 = vmatpush1.msra.mxu0 0.0
    %1640 = vmatprep.subr.mxu0 0.0
    %1641 = vmatpush1.msra.mxu0 0.0
    %1642 = vmatprep.subr.mxu0 0.0
    %1643 = vmatpush1.msra.mxu0 0.0
    %1644 = vmatprep.subr.mxu0 0.0
    %1645 = vmatpush1.msra.mxu0 0.0
    %1646 = vmatprep.subr.mxu0 0.0
    %1647 = vmatpush1.msra.mxu0 0.0
    %1648 = vmatprep.subr.mxu0 0.0
    %1649 = vmatpush1.msra.mxu0 0.0
    %1650 = vmatprep.subr.mxu0 0.0
    %1651 = vmatpush1.msra.mxu0 0.0
    %1652 = vmatprep.subr.mxu0 0.0
    %1653 = vmatpush1.msra.mxu0 0.0
    %1654 = vmatprep.subr.mxu0 0.0
    %1655 = vmatpush1.msra.mxu0 0.0
    %1656 = vmatprep.subr.mxu0 0.0
    %1657 = vmatpush1.msra.mxu0 0.0
    %1658 = vmatprep.subr.mxu0 0.0
    %1659 = vmatpush1.msra.mxu0 0.0
    %1660 = vmatprep.subr.mxu0 0.0
    %1661 = vmatpush1.msra.mxu0 0.0
    %1662 = vmatprep.subr.mxu0 0.0
    %1663 = vmatpush1.msra.mxu0 0.0
    %1664 = vmatprep.subr.mxu0 0.0
    %1665 = vmatpush1.msra.mxu0 0.0
    %1666 = vmatprep.mubr.f32.mxu0 0.0
    %1667 = vmatmul.mubr.f32.gmra.mrb[0].mxu0 %v1512
    %v1668 = vpop.f32.mrb[0].mxu0
    %v1669 = vadd.f32 0.0, %v1668
    %v1670 = vpop.f32.mrb[0].mxu0
    %v1671 = vadd.f32 0.0, %v1670
    %1672 = vmatprep.mubr.f32.mxu0 0.0
    %1673 = vmatmul.mubr.f32.gmra.mrb[0].mxu0 %v1513
    %v1674 = vpop.f32.mrb[0].mxu0
    %v1675 = vadd.f32 0.0, %v1674
    %v1676 = vpop.f32.mrb[0].mxu0
    %v1677 = vadd.f32 0.0, %v1676
    %1678 = vdwg.mxu0
    %v1679 = vadd.f32 %v1517, %v1592
    %v1680 = vadd.f32 %v1518, %v1594
    %v1681 = vadd.f32 %v1519, %v1669
    %v1682 = vadd.f32 %v1520, %v1671
    %v1683 = vadd.f32 %v1521, %v1598
    %v1684 = vadd.f32 %v1522, %v1600
    %v1685 = vadd.f32 %v1523, %v1675
    %v1686 = vadd.f32 %v1524, %v1677
    %v1687 = vxor.u32 %v1679, 2147483648
    %v1688 = vxor.u32 %v1680, 2147483648
    %v1689 = vxor.u32 %v1681, 2147483648
    %v1690 = vxor.u32 %v1683, 2147483648
    %v1691 = vxor.u32 %v1684, 2147483648
    %v1692 = vxor.u32 %v1685, 2147483648
    %v1693 = vmul.f32 %v1687, 1.442695
    %v1694 = vpow.pop %v1693
    %v1695 = vmul.f32 %v1688, 1.442695
    %v1696 = vpow.pop %v1695
    %v1697 = vmul.f32 %v1689, 1.442695
    %v1698 = vpow.pop %v1697
    %v1699 = vmul.f32 %v1690, 1.442695
    %v1700 = vpow.pop %v1699
    %v1701 = vmul.f32 %v1691, 1.442695
    %v1702 = vpow.pop %v1701
    %v1703 = vmul.f32 %v1692, 1.442695
    %v1704 = vpow.pop %v1703
    %v1705 = vadd.f32 %v1694, 1.0
    %v1706 = vadd.f32 %v1696, 1.0
    %v1707 = vadd.f32 %v1698, 1.0
    %v1708 = vadd.f32 %v1700, 1.0
    %v1709 = vadd.f32 %v1702, 1.0
    %v1710 = vadd.f32 %v1704, 1.0
    %v1711 = vrcp.pop %v1705
    %v1712 = vmul.f32 1.0, %v1711
    %v1713 = vrcp.pop %v1706
    %v1714 = vmul.f32 1.0, %v1713
    %v1715 = vrcp.pop %v1707
    %v1716 = vmul.f32 1.0, %v1715
    %v1717 = vrcp.pop %v1708
    %v1718 = vmul.f32 1.0, %v1717
    %v1719 = vrcp.pop %v1709
    %v1720 = vmul.f32 1.0, %v1719
    %v1721 = vrcp.pop %v1710
    %v1722 = vmul.f32 1.0, %v1721
    %v1723 = vtanh.pop %v1682
    %v1724 = vtanh.pop %v1686
    %v1725 = vmul.f32 %v1714, %v1508
    %v1726 = vmul.f32 %v1720, %v1509
    %v1727 = vmul.f32 %v1712, %v1723
    %v1728 = vmul.f32 %v1718, %v1724
    %v1729 = vadd.f32 %v1725, %v1727
    %v1730 = vadd.f32 %v1726, %v1728
    %v1731 = vtanh.pop %v1729
    %v1732 = vtanh.pop %v1730
    %v1733 = vmul.f32 %v1716, %v1731
    %v1734 = vmul.f32 %v1722, %v1732
    %s1735 = smul.u32 10, 4
    %s1736 = smul.addr %s1735, 8
    %s1737 = scalar_lea.vmem [#allocation4], %s1736
    %v1738 = vld [vmem:[%s1737] sm:$0xff]
    %v1739 = vld [vmem:[%s1737 + $0x8] sm:$0xff]
    %v1740 = vld [vmem:[%s1737 + $0x10] sm:$0xff]
    %v1741 = vld [vmem:[%s1737 + $0x18] sm:$0xff]
    %v1742 = vld [vmem:[%s1737 + $0x20] sm:$0xff]
    %v1743 = vld [vmem:[%s1737 + $0x28] sm:$0xff]
    %v1744 = vld [vmem:[%s1737 + $0x30] sm:$0xff]
    %v1745 = vld [vmem:[%s1737 + $0x38] sm:$0xff]
    %1746 = vmatprep.subr.mxu0 %v578
    %1747 = vmatpush1.msra.mxu0 %v577
    %1748 = vmatprep.subr.mxu0 %v582
    %1749 = vmatpush1.msra.mxu0 %v581
    %1750 = vmatprep.subr.mxu0 %v586
    %1751 = vmatpush1.msra.mxu0 %v585
    %1752 = vmatprep.subr.mxu0 %v590
    %1753 = vmatpush1.msra.mxu0 %v589
    %1754 = vmatprep.subr.mxu0 %v594
    %1755 = vmatpush1.msra.mxu0 %v593
    %1756 = vmatprep.subr.mxu0 %v598
    %1757 = vmatpush1.msra.mxu0 %v597
    %1758 = vmatprep.subr.mxu0 %v602
    %1759 = vmatpush1.msra.mxu0 %v601
    %1760 = vmatprep.subr.mxu0 %v606
    %1761 = vmatpush1.msra.mxu0 %v605
    %1762 = vmatprep.subr.mxu0 %v610
    %1763 = vmatpush1.msra.mxu0 %v609
    %1764 = vmatprep.subr.mxu0 %v614
    %1765 = vmatpush1.msra.mxu0 %v613
    %1766 = vmatprep.subr.mxu0 %v618
    %1767 = vmatpush1.msra.mxu0 %v617
    %1768 = vmatprep.subr.mxu0 %v622
    %1769 = vmatpush1.msra.mxu0 %v621
    %1770 = vmatprep.subr.mxu0 %v626
    %1771 = vmatpush1.msra.mxu0 %v625
    %1772 = vmatprep.subr.mxu0 %v630
    %1773 = vmatpush1.msra.mxu0 %v629
    %1774 = vmatprep.subr.mxu0 %v634
    %1775 = vmatpush1.msra.mxu0 %v633
    %1776 = vmatprep.subr.mxu0 %v638
    %1777 = vmatpush1.msra.mxu0 %v637
    %1778 = vmatprep.subr.mxu0 0.0
    %1779 = vmatpush1.msra.mxu0 0.0
    %1780 = vmatprep.subr.mxu0 0.0
    %1781 = vmatpush1.msra.mxu0 0.0
    %1782 = vmatprep.subr.mxu0 0.0
    %1783 = vmatpush1.msra.mxu0 0.0
    %1784 = vmatprep.subr.mxu0 0.0
    %1785 = vmatpush1.msra.mxu0 0.0
    %1786 = vmatprep.subr.mxu0 0.0
    %1787 = vmatpush1.msra.mxu0 0.0
    %1788 = vmatprep.subr.mxu0 0.0
    %1789 = vmatpush1.msra.mxu0 0.0
    %1790 = vmatprep.subr.mxu0 0.0
    %1791 = vmatpush1.msra.mxu0 0.0
    %1792 = vmatprep.subr.mxu0 0.0
    %1793 = vmatpush1.msra.mxu0 0.0
    %1794 = vmatprep.subr.mxu0 0.0
    %1795 = vmatpush1.msra.mxu0 0.0
    %1796 = vmatprep.subr.mxu0 0.0
    %1797 = vmatpush1.msra.mxu0 0.0
    %1798 = vmatprep.subr.mxu0 0.0
    %1799 = vmatpush1.msra.mxu0 0.0
    %1800 = vmatprep.subr.mxu0 0.0
    %1801 = vmatpush1.msra.mxu0 0.0
    %1802 = vmatprep.subr.mxu0 0.0
    %1803 = vmatpush1.msra.mxu0 0.0
    %1804 = vmatprep.subr.mxu0 0.0
    %1805 = vmatpush1.msra.mxu0 0.0
    %1806 = vmatprep.subr.mxu0 0.0
    %1807 = vmatpush1.msra.mxu0 0.0
    %1808 = vmatprep.subr.mxu0 0.0
    %1809 = vmatpush1.msra.mxu0 0.0
    %1810 = vmatprep.mubr.f32.mxu0 0.0
    %1811 = vmatmul.mubr.f32.gmra.mrb[0].mxu0 %v1733
    %v1812 = vpop.f32.mrb[0].mxu0
    %v1813 = vadd.f32 0.0, %v1812
    %v1814 = vpop.f32.mrb[0].mxu0
    %v1815 = vadd.f32 0.0, %v1814
    %1816 = vmatprep.mubr.f32.mxu0 0.0
    %1817 = vmatmul.mubr.f32.gmra.mrb[0].mxu0 %v1734
    %v1818 = vpop.f32.mrb[0].mxu0
    %v1819 = vadd.f32 0.0, %v1818
    %v1820 = vpop.f32.mrb[0].mxu0
    %v1821 = vadd.f32 0.0, %v1820
    %1822 = vdwg.mxu0
    %1823 = vmatprep.subr.mxu0 %v580
    %1824 = vmatpush1.msra.mxu0 %v579
    %1825 = vmatprep.subr.mxu0 %v584
    %1826 = vmatpush1.msra.mxu0 %v583
    %1827 = vmatprep.subr.mxu0 %v588
    %1828 = vmatpush1.msra.mxu0 %v587
    %1829 = vmatprep.subr.mxu0 %v592
    %1830 = vmatpush1.msra.mxu0 %v591
    %1831 = vmatprep.subr.mxu0 %v596
    %1832 = vmatpush1.msra.mxu0 %v595
    %1833 = vmatprep.subr.mxu0 %v600
    %1834 = vmatpush1.msra.mxu0 %v599
    %1835 = vmatprep.subr.mxu0 %v604
    %1836 = vmatpush1.msra.mxu0 %v603
    %1837 = vmatprep.subr.mxu0 %v608
    %1838 = vmatpush1.msra.mxu0 %v607
    %1839 = vmatprep.subr.mxu0 %v612
    %1840 = vmatpush1.msra.mxu0 %v611
    %1841 = vmatprep.subr.mxu0 %v616
    %1842 = vmatpush1.msra.mxu0 %v615
    %1843 = vmatprep.subr.mxu0 %v620
    %1844 = vmatpush1.msra.mxu0 %v619
    %1845 = vmatprep.subr.mxu0 %v624
    %1846 = vmatpush1.msra.mxu0 %v623
    %1847 = vmatprep.subr.mxu0 %v628
    %1848 = vmatpush1.msra.mxu0 %v627
    %1849 = vmatprep.subr.mxu0 %v632
    %1850 = vmatpush1.msra.mxu0 %v631
    %1851 = vmatprep.subr.mxu0 %v636
    %1852 = vmatpush1.msra.mxu0 %v635
    %1853 = vmatprep.subr.mxu0 %v640
    %1854 = vmatpush1.msra.mxu0 %v639
    %1855 = vmatprep.subr.mxu0 0.0
    %1856 = vmatpush1.msra.mxu0 0.0
    %1857 = vmatprep.subr.mxu0 0.0
    %1858 = vmatpush1.msra.mxu0 0.0
    %1859 = vmatprep.subr.mxu0 0.0
    %1860 = vmatpush1.msra.mxu0 0.0
    %1861 = vmatprep.subr.mxu0 0.0
    %1862 = vmatpush1.msra.mxu0 0.0
    %1863 = vmatprep.subr.mxu0 0.0
    %1864 = vmatpush1.msra.mxu0 0.0
    %1865 = vmatprep.subr.mxu0 0.0
    %1866 = vmatpush1.msra.mxu0 0.0
    %1867 = vmatprep.subr.mxu0 0.0
    %1868 = vmatpush1.msra.mxu0 0.0
    %1869 = vmatprep.subr.mxu0 0.0
    %1870 = vmatpush1.msra.mxu0 0.0
    %1871 = vmatprep.subr.mxu0 0.0
    %1872 = vmatpush1.msra.mxu0 0.0
    %1873 = vmatprep.subr.mxu0 0.0
    %1874 = vmatpush1.msra.mxu0 0.0
    %1875 = vmatprep.subr.mxu0 0.0
    %1876 = vmatpush1.msra.mxu0 0.0
    %1877 = vmatprep.subr.mxu0 0.0
    %1878 = vmatpush1.msra.mxu0 0.0
    %1879 = vmatprep.subr.mxu0 0.0
    %1880 = vmatpush1.msra.mxu0 0.0
    %1881 = vmatprep.subr.mxu0 0.0
    %1882 = vmatpush1.msra.mxu0 0.0
    %1883 = vmatprep.subr.mxu0 0.0
    %1884 = vmatpush1.msra.mxu0 0.0
    %1885 = vmatprep.subr.mxu0 0.0
    %1886 = vmatpush1.msra.mxu0 0.0
    %1887 = vmatprep.mubr.f32.mxu0 0.0
    %1888 = vmatmul.mubr.f32.gmra.mrb[0].mxu0 %v1733
    %v1889 = vpop.f32.mrb[0].mxu0
    %v1890 = vadd.f32 0.0, %v1889
    %v1891 = vpop.f32.mrb[0].mxu0
    %v1892 = vadd.f32 0.0, %v1891
    %1893 = vmatprep.mubr.f32.mxu0 0.0
    %1894 = vmatmul.mubr.f32.gmra.mrb[0].mxu0 %v1734
    %v1895 = vpop.f32.mrb[0].mxu0
    %v1896 = vadd.f32 0.0, %v1895
    %v1897 = vpop.f32.mrb[0].mxu0
    %v1898 = vadd.f32 0.0, %v1897
    %1899 = vdwg.mxu0
    %v1900 = vadd.f32 %v1738, %v1813
    %v1901 = vadd.f32 %v1739, %v1815
    %v1902 = vadd.f32 %v1740, %v1890
    %v1903 = vadd.f32 %v1741, %v1892
    %v1904 = vadd.f32 %v1742, %v1819
    %v1905 = vadd.f32 %v1743, %v1821
    %v1906 = vadd.f32 %v1744, %v1896
    %v1907 = vadd.f32 %v1745, %v1898
    %v1908 = vxor.u32 %v1900, 2147483648
    %v1909 = vxor.u32 %v1901, 2147483648
    %v1910 = vxor.u32 %v1902, 2147483648
    %v1911 = vxor.u32 %v1904, 2147483648
    %v1912 = vxor.u32 %v1905, 2147483648
    %v1913 = vxor.u32 %v1906, 2147483648
    %v1914 = vmul.f32 %v1908, 1.442695
    %v1915 = vpow.pop %v1914
    %v1916 = vmul.f32 %v1909, 1.442695
    %v1917 = vpow.pop %v1916
    %v1918 = vmul.f32 %v1910, 1.442695
    %v1919 = vpow.pop %v1918
    %v1920 = vmul.f32 %v1911, 1.442695
    %v1921 = vpow.pop %v1920
    %v1922 = vmul.f32 %v1912, 1.442695
    %v1923 = vpow.pop %v1922
    %v1924 = vmul.f32 %v1913, 1.442695
    %v1925 = vpow.pop %v1924
    %v1926 = vadd.f32 %v1915, 1.0
    %v1927 = vadd.f32 %v1917, 1.0
    %v1928 = vadd.f32 %v1919, 1.0
    %v1929 = vadd.f32 %v1921, 1.0
    %v1930 = vadd.f32 %v1923, 1.0
    %v1931 = vadd.f32 %v1925, 1.0
    %v1932 = vrcp.pop %v1926
    %v1933 = vmul.f32 1.0, %v1932
    %v1934 = vrcp.pop %v1927
    %v1935 = vmul.f32 1.0, %v1934
    %v1936 = vrcp.pop %v1928
    %v1937 = vmul.f32 1.0, %v1936
    %v1938 = vrcp.pop %v1929
    %v1939 = vmul.f32 1.0, %v1938
    %v1940 = vrcp.pop %v1930
    %v1941 = vmul.f32 1.0, %v1940
    %v1942 = vrcp.pop %v1931
    %v1943 = vmul.f32 1.0, %v1942
    %v1944 = vtanh.pop %v1903
    %v1945 = vtanh.pop %v1907
    %v1946 = vmul.f32 %v1935, %v1729
    %v1947 = vmul.f32 %v1941, %v1730
    %v1948 = vmul.f32 %v1933, %v1944
    %v1949 = vmul.f32 %v1939, %v1945
    %v1950 = vadd.f32 %v1946, %v1948
    %v1951 = vadd.f32 %v1947, %v1949
    %v1952 = vtanh.pop %v1950
    %v1953 = vtanh.pop %v1951
    %v1954 = vmul.f32 %v1937, %v1952
    %v1955 = vmul.f32 %v1943, %v1953
    %s1956 = smul.u32 12, 4
    %s1957 = smul.addr %s1956, 8
    %s1958 = scalar_lea.vmem [#allocation4], %s1957
    %v1959 = vld [vmem:[%s1958] sm:$0xff]
    %v1960 = vld [vmem:[%s1958 + $0x8] sm:$0xff]
    %v1961 = vld [vmem:[%s1958 + $0x10] sm:$0xff]
    %v1962 = vld [vmem:[%s1958 + $0x18] sm:$0xff]
    %v1963 = vld [vmem:[%s1958 + $0x20] sm:$0xff]
    %v1964 = vld [vmem:[%s1958 + $0x28] sm:$0xff]
    %v1965 = vld [vmem:[%s1958 + $0x30] sm:$0xff]
    %v1966 = vld [vmem:[%s1958 + $0x38] sm:$0xff]
    %1967 = vmatprep.subr.mxu0 %v578
    %1968 = vmatpush1.msra.mxu0 %v577
    %1969 = vmatprep.subr.mxu0 %v582
    %1970 = vmatpush1.msra.mxu0 %v581
    %1971 = vmatprep.subr.mxu0 %v586
    %1972 = vmatpush1.msra.mxu0 %v585
    %1973 = vmatprep.subr.mxu0 %v590
    %1974 = vmatpush1.msra.mxu0 %v589
    %1975 = vmatprep.subr.mxu0 %v594
    %1976 = vmatpush1.msra.mxu0 %v593
    %1977 = vmatprep.subr.mxu0 %v598
    %1978 = vmatpush1.msra.mxu0 %v597
    %1979 = vmatprep.subr.mxu0 %v602
    %1980 = vmatpush1.msra.mxu0 %v601
    %1981 = vmatprep.subr.mxu0 %v606
    %1982 = vmatpush1.msra.mxu0 %v605
    %1983 = vmatprep.subr.mxu0 %v610
    %1984 = vmatpush1.msra.mxu0 %v609
    %1985 = vmatprep.subr.mxu0 %v614
    %1986 = vmatpush1.msra.mxu0 %v613
    %1987 = vmatprep.subr.mxu0 %v618
    %1988 = vmatpush1.msra.mxu0 %v617
    %1989 = vmatprep.subr.mxu0 %v622
    %1990 = vmatpush1.msra.mxu0 %v621
    %1991 = vmatprep.subr.mxu0 %v626
    %1992 = vmatpush1.msra.mxu0 %v625
    %1993 = vmatprep.subr.mxu0 %v630
    %1994 = vmatpush1.msra.mxu0 %v629
    %1995 = vmatprep.subr.mxu0 %v634
    %1996 = vmatpush1.msra.mxu0 %v633
    %1997 = vmatprep.subr.mxu0 %v638
    %1998 = vmatpush1.msra.mxu0 %v637
    %1999 = vmatprep.subr.mxu0 0.0
    %2000 = vmatpush1.msra.mxu0 0.0
    %2001 = vmatprep.subr.mxu0 0.0
    %2002 = vmatpush1.msra.mxu0 0.0
    %2003 = vmatprep.subr.mxu0 0.0
    %2004 = vmatpush1.msra.mxu0 0.0
    %2005 = vmatprep.subr.mxu0 0.0
    %2006 = vmatpush1.msra.mxu0 0.0
    %2007 = vmatprep.subr.mxu0 0.0
    %2008 = vmatpush1.msra.mxu0 0.0
    %2009 = vmatprep.subr.mxu0 0.0
    %2010 = vmatpush1.msra.mxu0 0.0
    %2011 = vmatprep.subr.mxu0 0.0
    %2012 = vmatpush1.msra.mxu0 0.0
    %2013 = vmatprep.subr.mxu0 0.0
    %2014 = vmatpush1.msra.mxu0 0.0
    %2015 = vmatprep.subr.mxu0 0.0
    %2016 = vmatpush1.msra.mxu0 0.0
    %2017 = vmatprep.subr.mxu0 0.0
    %2018 = vmatpush1.msra.mxu0 0.0
    %2019 = vmatprep.subr.mxu0 0.0
    %2020 = vmatpush1.msra.mxu0 0.0
    %2021 = vmatprep.subr.mxu0 0.0
    %2022 = vmatpush1.msra.mxu0 0.0
    %2023 = vmatprep.subr.mxu0 0.0
    %2024 = vmatpush1.msra.mxu0 0.0
    %2025 = vmatprep.subr.mxu0 0.0
    %2026 = vmatpush1.msra.mxu0 0.0
    %2027 = vmatprep.subr.mxu0 0.0
    %2028 = vmatpush1.msra.mxu0 0.0
    %2029 = vmatprep.subr.mxu0 0.0
    %2030 = vmatpush1.msra.mxu0 0.0
    %2031 = vmatprep.mubr.f32.mxu0 0.0
    %2032 = vmatmul.mubr.f32.gmra.mrb[0].mxu0 %v1954
    %v2033 = vpop.f32.mrb[0].mxu0
    %v2034 = vadd.f32 0.0, %v2033
    %v2035 = vpop.f32.mrb[0].mxu0
    %v2036 = vadd.f32 0.0, %v2035
    %2037 = vmatprep.mubr.f32.mxu0 0.0
    %2038 = vmatmul.mubr.f32.gmra.mrb[0].mxu0 %v1955
    %v2039 = vpop.f32.mrb[0].mxu0
    %v2040 = vadd.f32 0.0, %v2039
    %v2041 = vpop.f32.mrb[0].mxu0
    %v2042 = vadd.f32 0.0, %v2041
    %2043 = vdwg.mxu0
    %2044 = vmatprep.subr.mxu0 %v580
    %2045 = vmatpush1.msra.mxu0 %v579
    %2046 = vmatprep.subr.mxu0 %v584
    %2047 = vmatpush1.msra.mxu0 %v583
    %2048 = vmatprep.subr.mxu0 %v588
    %2049 = vmatpush1.msra.mxu0 %v587
    %2050 = vmatprep.subr.mxu0 %v592
    %2051 = vmatpush1.msra.mxu0 %v591
    %2052 = vmatprep.subr.mxu0 %v596
    %2053 = vmatpush1.msra.mxu0 %v595
    %2054 = vmatprep.subr.mxu0 %v600
    %2055 = vmatpush1.msra.mxu0 %v599
    %2056 = vmatprep.subr.mxu0 %v604
    %2057 = vmatpush1.msra.mxu0 %v603
    %2058 = vmatprep.subr.mxu0 %v608
    %2059 = vmatpush1.msra.mxu0 %v607
    %2060 = vmatprep.subr.mxu0 %v612
    %2061 = vmatpush1.msra.mxu0 %v611
    %2062 = vmatprep.subr.mxu0 %v616
    %2063 = vmatpush1.msra.mxu0 %v615
    %2064 = vmatprep.subr.mxu0 %v620
    %2065 = vmatpush1.msra.mxu0 %v619
    %2066 = vmatprep.subr.mxu0 %v624
    %2067 = vmatpush1.msra.mxu0 %v623
    %2068 = vmatprep.subr.mxu0 %v628
    %2069 = vmatpush1.msra.mxu0 %v627
    %2070 = vmatprep.subr.mxu0 %v632
    %2071 = vmatpush1.msra.mxu0 %v631
    %2072 = vmatprep.subr.mxu0 %v636
    %2073 = vmatpush1.msra.mxu0 %v635
    %2074 = vmatprep.subr.mxu0 %v640
    %2075 = vmatpush1.msra.mxu0 %v639
    %2076 = vmatprep.subr.mxu0 0.0
    %2077 = vmatpush1.msra.mxu0 0.0
    %2078 = vmatprep.subr.mxu0 0.0
    %2079 = vmatpush1.msra.mxu0 0.0
    %2080 = vmatprep.subr.mxu0 0.0
    %2081 = vmatpush1.msra.mxu0 0.0
    %2082 = vmatprep.subr.mxu0 0.0
    %2083 = vmatpush1.msra.mxu0 0.0
    %2084 = vmatprep.subr.mxu0 0.0
    %2085 = vmatpush1.msra.mxu0 0.0
    %2086 = vmatprep.subr.mxu0 0.0
    %2087 = vmatpush1.msra.mxu0 0.0
    %2088 = vmatprep.subr.mxu0 0.0
    %2089 = vmatpush1.msra.mxu0 0.0
    %2090 = vmatprep.subr.mxu0 0.0
    %2091 = vmatpush1.msra.mxu0 0.0
    %2092 = vmatprep.subr.mxu0 0.0
    %2093 = vmatpush1.msra.mxu0 0.0
    %2094 = vmatprep.subr.mxu0 0.0
    %2095 = vmatpush1.msra.mxu0 0.0
    %2096 = vmatprep.subr.mxu0 0.0
    %2097 = vmatpush1.msra.mxu0 0.0
    %2098 = vmatprep.subr.mxu0 0.0
    %2099 = vmatpush1.msra.mxu0 0.0
    %2100 = vmatprep.subr.mxu0 0.0
    %2101 = vmatpush1.msra.mxu0 0.0
    %2102 = vmatprep.subr.mxu0 0.0
    %2103 = vmatpush1.msra.mxu0 0.0
    %2104 = vmatprep.subr.mxu0 0.0
    %2105 = vmatpush1.msra.mxu0 0.0
    %2106 = vmatprep.subr.mxu0 0.0
    %2107 = vmatpush1.msra.mxu0 0.0
    %2108 = vmatprep.mubr.f32.mxu0 0.0
    %2109 = vmatmul.mubr.f32.gmra.mrb[0].mxu0 %v1954
    %v2110 = vpop.f32.mrb[0].mxu0
    %v2111 = vadd.f32 0.0, %v2110
    %v2112 = vpop.f32.mrb[0].mxu0
    %v2113 = vadd.f32 0.0, %v2112
    %2114 = vmatprep.mubr.f32.mxu0 0.0
    %2115 = vmatmul.mubr.f32.gmra.mrb[0].mxu0 %v1955
    %v2116 = vpop.f32.mrb[0].mxu0
    %v2117 = vadd.f32 0.0, %v2116
    %v2118 = vpop.f32.mrb[0].mxu0
    %v2119 = vadd.f32 0.0, %v2118
    %2120 = vdwg.mxu0
    %v2121 = vadd.f32 %v1959, %v2034
    %v2122 = vadd.f32 %v1960, %v2036
    %v2123 = vadd.f32 %v1961, %v2111
    %v2124 = vadd.f32 %v1962, %v2113
    %v2125 = vadd.f32 %v1963, %v2040
    %v2126 = vadd.f32 %v1964, %v2042
    %v2127 = vadd.f32 %v1965, %v2117
    %v2128 = vadd.f32 %v1966, %v2119
    %v2129 = vxor.u32 %v2121, 2147483648
    %v2130 = vxor.u32 %v2122, 2147483648
    %v2131 = vxor.u32 %v2123, 2147483648
    %v2132 = vxor.u32 %v2125, 2147483648
    %v2133 = vxor.u32 %v2126, 2147483648
    %v2134 = vxor.u32 %v2127, 2147483648
    %v2135 = vmul.f32 %v2129, 1.442695
    %v2136 = vpow.pop %v2135
    %v2137 = vmul.f32 %v2130, 1.442695
    %v2138 = vpow.pop %v2137
    %v2139 = vmul.f32 %v2131, 1.442695
    %v2140 = vpow.pop %v2139
    %v2141 = vmul.f32 %v2132, 1.442695
    %v2142 = vpow.pop %v2141
    %v2143 = vmul.f32 %v2133, 1.442695
    %v2144 = vpow.pop %v2143
    %v2145 = vmul.f32 %v2134, 1.442695
    %v2146 = vpow.pop %v2145
    %v2147 = vadd.f32 %v2136, 1.0
    %v2148 = vadd.f32 %v2138, 1.0
    %v2149 = vadd.f32 %v2140, 1.0
    %v2150 = vadd.f32 %v2142, 1.0
    %v2151 = vadd.f32 %v2144, 1.0
    %v2152 = vadd.f32 %v2146, 1.0
    %v2153 = vrcp.pop %v2147
    %v2154 = vmul.f32 1.0, %v2153
    %v2155 = vrcp.pop %v2148
    %v2156 = vmul.f32 1.0, %v2155
    %v2157 = vrcp.pop %v2149
    %v2158 = vmul.f32 1.0, %v2157
    %v2159 = vrcp.pop %v2150
    %v2160 = vmul.f32 1.0, %v2159
    %v2161 = vrcp.pop %v2151
    %v2162 = vmul.f32 1.0, %v2161
    %v2163 = vrcp.pop %v2152
    %v2164 = vmul.f32 1.0, %v2163
    %v2165 = vtanh.pop %v2124
    %v2166 = vtanh.pop %v2128
    %v2167 = vmul.f32 %v2156, %v1950
    %v2168 = vmul.f32 %v2162, %v1951
    %v2169 = vmul.f32 %v2154, %v2165
    %v2170 = vmul.f32 %v2160, %v2166
    %v2171 = vadd.f32 %v2167, %v2169
    %v2172 = vadd.f32 %v2168, %v2170
    %v2173 = vtanh.pop %v2171
    %v2174 = vtanh.pop %v2172
    %v2175 = vmul.f32 %v2158, %v2173
    %v2176 = vmul.f32 %v2164, %v2174
    %s2177 = smul.u32 14, 4
    %s2178 = smul.addr %s2177, 8
    %s2179 = scalar_lea.vmem [#allocation4], %s2178
    %v2180 = vld [vmem:[%s2179] sm:$0xff]
    %v2181 = vld [vmem:[%s2179 + $0x8] sm:$0xff]
    %v2182 = vld [vmem:[%s2179 + $0x10] sm:$0xff]
    %v2183 = vld [vmem:[%s2179 + $0x18] sm:$0xff]
    %v2184 = vld [vmem:[%s2179 + $0x20] sm:$0xff]
    %v2185 = vld [vmem:[%s2179 + $0x28] sm:$0xff]
    %v2186 = vld [vmem:[%s2179 + $0x30] sm:$0xff]
    %v2187 = vld [vmem:[%s2179 + $0x38] sm:$0xff]
    %2188 = vmatprep.subr.mxu0 %v578
    %2189 = vmatpush1.msra.mxu0 %v577
    %2190 = vmatprep.subr.mxu0 %v582
    %2191 = vmatpush1.msra.mxu0 %v581
    %2192 = vmatprep.subr.mxu0 %v586
    %2193 = vmatpush1.msra.mxu0 %v585
    %2194 = vmatprep.subr.mxu0 %v590
    %2195 = vmatpush1.msra.mxu0 %v589
    %2196 = vmatprep.subr.mxu0 %v594
    %2197 = vmatpush1.msra.mxu0 %v593
    %2198 = vmatprep.subr.mxu0 %v598
    %2199 = vmatpush1.msra.mxu0 %v597
    %2200 = vmatprep.subr.mxu0 %v602
    %2201 = vmatpush1.msra.mxu0 %v601
    %2202 = vmatprep.subr.mxu0 %v606
    %2203 = vmatpush1.msra.mxu0 %v605
    %2204 = vmatprep.subr.mxu0 %v610
    %2205 = vmatpush1.msra.mxu0 %v609
    %2206 = vmatprep.subr.mxu0 %v614
    %2207 = vmatpush1.msra.mxu0 %v613
    %2208 = vmatprep.subr.mxu0 %v618
    %2209 = vmatpush1.msra.mxu0 %v617
    %2210 = vmatprep.subr.mxu0 %v622
    %2211 = vmatpush1.msra.mxu0 %v621
    %2212 = vmatprep.subr.mxu0 %v626
    %2213 = vmatpush1.msra.mxu0 %v625
    %2214 = vmatprep.subr.mxu0 %v630
    %2215 = vmatpush1.msra.mxu0 %v629
    %2216 = vmatprep.subr.mxu0 %v634
    %2217 = vmatpush1.msra.mxu0 %v633
    %2218 = vmatprep.subr.mxu0 %v638
    %2219 = vmatpush1.msra.mxu0 %v637
    %2220 = vmatprep.subr.mxu0 0.0
    %2221 = vmatpush1.msra.mxu0 0.0
    %2222 = vmatprep.subr.mxu0 0.0
    %2223 = vmatpush1.msra.mxu0 0.0
    %2224 = vmatprep.subr.mxu0 0.0
    %2225 = vmatpush1.msra.mxu0 0.0
    %2226 = vmatprep.subr.mxu0 0.0
    %2227 = vmatpush1.msra.mxu0 0.0
    %2228 = vmatprep.subr.mxu0 0.0
    %2229 = vmatpush1.msra.mxu0 0.0
    %2230 = vmatprep.subr.mxu0 0.0
    %2231 = vmatpush1.msra.mxu0 0.0
    %2232 = vmatprep.subr.mxu0 0.0
    %2233 = vmatpush1.msra.mxu0 0.0
    %2234 = vmatprep.subr.mxu0 0.0
    %2235 = vmatpush1.msra.mxu0 0.0
    %2236 = vmatprep.subr.mxu0 0.0
    %2237 = vmatpush1.msra.mxu0 0.0
    %2238 = vmatprep.subr.mxu0 0.0
    %2239 = vmatpush1.msra.mxu0 0.0
    %2240 = vmatprep.subr.mxu0 0.0
    %2241 = vmatpush1.msra.mxu0 0.0
    %2242 = vmatprep.subr.mxu0 0.0
    %2243 = vmatpush1.msra.mxu0 0.0
    %2244 = vmatprep.subr.mxu0 0.0
    %2245 = vmatpush1.msra.mxu0 0.0
    %2246 = vmatprep.subr.mxu0 0.0
    %2247 = vmatpush1.msra.mxu0 0.0
    %2248 = vmatprep.subr.mxu0 0.0
    %2249 = vmatpush1.msra.mxu0 0.0
    %2250 = vmatprep.subr.mxu0 0.0
    %2251 = vmatpush1.msra.mxu0 0.0
    %2252 = vmatprep.mubr.f32.mxu0 0.0
    %2253 = vmatmul.mubr.f32.gmra.mrb[0].mxu0 %v2175
    %v2254 = vpop.f32.mrb[0].mxu0
    %v2255 = vadd.f32 0.0, %v2254
    %v2256 = vpop.f32.mrb[0].mxu0
    %v2257 = vadd.f32 0.0, %v2256
    %2258 = vmatprep.mubr.f32.mxu0 0.0
    %2259 = vmatmul.mubr.f32.gmra.mrb[0].mxu0 %v2176
    %v2260 = vpop.f32.mrb[0].mxu0
    %v2261 = vadd.f32 0.0, %v2260
    %v2262 = vpop.f32.mrb[0].mxu0
    %v2263 = vadd.f32 0.0, %v2262
    %2264 = vdwg.mxu0
    %2265 = vmatprep.subr.mxu0 %v580
    %2266 = vmatpush1.msra.mxu0 %v579
    %2267 = vmatprep.subr.mxu0 %v584
    %2268 = vmatpush1.msra.mxu0 %v583
    %2269 = vmatprep.subr.mxu0 %v588
    %2270 = vmatpush1.msra.mxu0 %v587
    %2271 = vmatprep.subr.mxu0 %v592
    %2272 = vmatpush1.msra.mxu0 %v591
    %2273 = vmatprep.subr.mxu0 %v596
    %2274 = vmatpush1.msra.mxu0 %v595
    %2275 = vmatprep.subr.mxu0 %v600
    %2276 = vmatpush1.msra.mxu0 %v599
    %2277 = vmatprep.subr.mxu0 %v604
    %2278 = vmatpush1.msra.mxu0 %v603
    %2279 = vmatprep.subr.mxu0 %v608
    %2280 = vmatpush1.msra.mxu0 %v607
    %2281 = vmatprep.subr.mxu0 %v612
    %2282 = vmatpush1.msra.mxu0 %v611
    %2283 = vmatprep.subr.mxu0 %v616
    %2284 = vmatpush1.msra.mxu0 %v615
    %2285 = vmatprep.subr.mxu0 %v620
    %2286 = vmatpush1.msra.mxu0 %v619
    %2287 = vmatprep.subr.mxu0 %v624
    %2288 = vmatpush1.msra.mxu0 %v623
    %2289 = vmatprep.subr.mxu0 %v628
    %2290 = vmatpush1.msra.mxu0 %v627
    %2291 = vmatprep.subr.mxu0 %v632
    %2292 = vmatpush1.msra.mxu0 %v631
    %2293 = vmatprep.subr.mxu0 %v636
    %2294 = vmatpush1.msra.mxu0 %v635
    %2295 = vmatprep.subr.mxu0 %v640
    %2296 = vmatpush1.msra.mxu0 %v639
    %2297 = vmatprep.subr.mxu0 0.0
    %2298 = vmatpush1.msra.mxu0 0.0
    %2299 = vmatprep.subr.mxu0 0.0
    %2300 = vmatpush1.msra.mxu0 0.0
    %2301 = vmatprep.subr.mxu0 0.0
    %2302 = vmatpush1.msra.mxu0 0.0
    %2303 = vmatprep.subr.mxu0 0.0
    %2304 = vmatpush1.msra.mxu0 0.0
    %2305 = vmatprep.subr.mxu0 0.0
    %2306 = vmatpush1.msra.mxu0 0.0
    %2307 = vmatprep.subr.mxu0 0.0
    %2308 = vmatpush1.msra.mxu0 0.0
    %2309 = vmatprep.subr.mxu0 0.0
    %2310 = vmatpush1.msra.mxu0 0.0
    %2311 = vmatprep.subr.mxu0 0.0
    %2312 = vmatpush1.msra.mxu0 0.0
    %2313 = vmatprep.subr.mxu0 0.0
    %2314 = vmatpush1.msra.mxu0 0.0
    %2315 = vmatprep.subr.mxu0 0.0
    %2316 = vmatpush1.msra.mxu0 0.0
    %2317 = vmatprep.subr.mxu0 0.0
    %2318 = vmatpush1.msra.mxu0 0.0
    %2319 = vmatprep.subr.mxu0 0.0
    %2320 = vmatpush1.msra.mxu0 0.0
    %2321 = vmatprep.subr.mxu0 0.0
    %2322 = vmatpush1.msra.mxu0 0.0
    %2323 = vmatprep.subr.mxu0 0.0
    %2324 = vmatpush1.msra.mxu0 0.0
    %2325 = vmatprep.subr.mxu0 0.0
    %2326 = vmatpush1.msra.mxu0 0.0
    %2327 = vmatprep.subr.mxu0 0.0
    %2328 = vmatpush1.msra.mxu0 0.0
    %2329 = vmatprep.mubr.f32.mxu0 0.0
    %2330 = vmatmul.mubr.f32.gmra.mrb[0].mxu0 %v2175
    %v2331 = vpop.f32.mrb[0].mxu0
    %v2332 = vadd.f32 0.0, %v2331
    %v2333 = vpop.f32.mrb[0].mxu0
    %v2334 = vadd.f32 0.0, %v2333
    %2335 = vmatprep.mubr.f32.mxu0 0.0
    %2336 = vmatmul.mubr.f32.gmra.mrb[0].mxu0 %v2176
    %v2337 = vpop.f32.mrb[0].mxu0
    %v2338 = vadd.f32 0.0, %v2337
    %v2339 = vpop.f32.mrb[0].mxu0
    %v2340 = vadd.f32 0.0, %v2339
    %2341 = vdwg.mxu0
    %v2342 = vadd.f32 %v2180, %v2255
    %v2343 = vadd.f32 %v2181, %v2257
    %v2344 = vadd.f32 %v2182, %v2332
    %v2345 = vadd.f32 %v2183, %v2334
    %v2346 = vadd.f32 %v2184, %v2261
    %v2347 = vadd.f32 %v2185, %v2263
    %v2348 = vadd.f32 %v2186, %v2338
    %v2349 = vadd.f32 %v2187, %v2340
    %v2350 = vxor.u32 %v2342, 2147483648
    %v2351 = vxor.u32 %v2343, 2147483648
    %v2352 = vxor.u32 %v2344, 2147483648
    %v2353 = vxor.u32 %v2346, 2147483648
    %v2354 = vxor.u32 %v2347, 2147483648
    %v2355 = vxor.u32 %v2348, 2147483648
    %v2356 = vmul.f32 %v2350, 1.442695
    %v2357 = vpow.pop %v2356
    %v2358 = vmul.f32 %v2351, 1.442695
    %v2359 = vpow.pop %v2358
    %v2360 = vmul.f32 %v2352, 1.442695
    %v2361 = vpow.pop %v2360
    %v2362 = vmul.f32 %v2353, 1.442695
    %v2363 = vpow.pop %v2362
    %v2364 = vmul.f32 %v2354, 1.442695
    %v2365 = vpow.pop %v2364
    %v2366 = vmul.f32 %v2355, 1.442695
    %v2367 = vpow.pop %v2366
    %v2368 = vadd.f32 %v2357, 1.0
    %v2369 = vadd.f32 %v2359, 1.0
    %v2370 = vadd.f32 %v2361, 1.0
    %v2371 = vadd.f32 %v2363, 1.0
    %v2372 = vadd.f32 %v2365, 1.0
    %v2373 = vadd.f32 %v2367, 1.0
    %v2374 = vrcp.pop %v2368
    %v2375 = vmul.f32 1.0, %v2374
    %v2376 = vrcp.pop %v2369
    %v2377 = vmul.f32 1.0, %v2376
    %v2378 = vrcp.pop %v2370
    %v2379 = vmul.f32 1.0, %v2378
    %v2380 = vrcp.pop %v2371
    %v2381 = vmul.f32 1.0, %v2380
    %v2382 = vrcp.pop %v2372
    %v2383 = vmul.f32 1.0, %v2382
    %v2384 = vrcp.pop %v2373
    %v2385 = vmul.f32 1.0, %v2384
    %v2386 = vtanh.pop %v2345
    %v2387 = vtanh.pop %v2349
    %v2388 = vmul.f32 %v2377, %v2171
    %v2389 = vmul.f32 %v2383, %v2172
    %v2390 = vmul.f32 %v2375, %v2386
    %v2391 = vmul.f32 %v2381, %v2387
    %v2392 = vadd.f32 %v2388, %v2390
    %v2393 = vadd.f32 %v2389, %v2391
    %v2394 = vtanh.pop %v2392
    %v2395 = vtanh.pop %v2393
    %v2396 = vmul.f32 %v2379, %v2394
    %v2397 = vmul.f32 %v2385, %v2395
    %2398 = vst [vmem:[#allocation2] sm:$0xff] %v2396
    %2399 = vst [vmem:[#allocation2 + $0x8] sm:$0xff] %v2397
    %2400 = vst [vmem:[#allocation3] sm:$0xff] %v2392
    %2401 = vst [vmem:[#allocation3 + $0x8] sm:$0xff] %v2393
    // Predicated region
    $region38: #{tpu_custom_call.1} parent=1 // pred_check
      %p2402 = pneg %p52
    $region39: #{tpu_custom_call.1} parent=1 // pred_check_branch
      %2404 = sbr.rel (%p2402) target = $region41
    $region40: #{tpu_custom_call.1} parent=1 // pred_region
      %v2405 = vld [vmem:[#allocation8] sm:$0xff]
      %v2406 = vld [vmem:[#allocation8 + $0x8] sm:$0xff]
      %v2407 = vld [vmem:[#allocation8 + $0x10] sm:$0xff]
      %v2408 = vld [vmem:[#allocation8 + $0x18] sm:$0xff]
      %v2409 = vld [vmem:[#allocation8 + $0x20] sm:$0xff]
      %v2410 = vld [vmem:[#allocation8 + $0x28] sm:$0xff]
      %v2411 = vld [vmem:[#allocation8 + $0x30] sm:$0xff]
      %v2412 = vld [vmem:[#allocation8 + $0x38] sm:$0xff]
      %v2413 = vld [vmem:[#allocation8 + $0x40] sm:$0xff]
      %v2414 = vld [vmem:[#allocation8 + $0x48] sm:$0xff]
      %v2415 = vld [vmem:[#allocation8 + $0x50] sm:$0xff]
      %v2416 = vld [vmem:[#allocation8 + $0x58] sm:$0xff]
      %v2417 = vld [vmem:[#allocation8 + $0x60] sm:$0xff]
      %v2418 = vld [vmem:[#allocation8 + $0x68] sm:$0xff]
      %v2419 = vld [vmem:[#allocation8 + $0x70] sm:$0xff]
      %v2420 = vld [vmem:[#allocation8 + $0x78] sm:$0xff]
      %v2421 = vld [vmem:[%s5] sm:$0x1]
      %v2423 = vlaneseq
      %v2424 = vshrl.u32 %v2423, 7
      %v2425 = vsub.s32 0, %v2424
      %v2426 = vrot.slane %v2421, %v2425
      %2428 = vmatprep.subr.mxu0 0.0
      %2429 = vmatpush1.msra.mxu0 %v2405
      %2430 = vmatprep.subr.mxu0 0.0
      %2431 = vmatpush1.msra.mxu0 %v2406
      %2432 = vmatprep.subr.mxu0 0.0
      %2433 = vmatpush1.msra.mxu0 %v2407
      %2434 = vmatprep.subr.mxu0 0.0
      %2435 = vmatpush1.msra.mxu0 %v2408
      %2436 = vmatprep.subr.mxu0 0.0
      %2437 = vmatpush1.msra.mxu0 %v2409
      %2438 = vmatprep.subr.mxu0 0.0
      %2439 = vmatpush1.msra.mxu0 %v2410
      %2440 = vmatprep.subr.mxu0 0.0
      %2441 = vmatpush1.msra.mxu0 %v2411
      %2442 = vmatprep.subr.mxu0 0.0
      %2443 = vmatpush1.msra.mxu0 %v2412
      %2444 = vmatprep.subr.mxu0 0.0
      %2445 = vmatpush1.msra.mxu0 %v2413
      %2446 = vmatprep.subr.mxu0 0.0
      %2447 = vmatpush1.msra.mxu0 %v2414
      %2448 = vmatprep.subr.mxu0 0.0
      %2449 = vmatpush1.msra.mxu0 %v2415
      %2450 = vmatprep.subr.mxu0 0.0
      %2451 = vmatpush1.msra.mxu0 %v2416
      %2452 = vmatprep.subr.mxu0 0.0
      %2453 = vmatpush1.msra.mxu0 %v2417
      %2454 = vmatprep.subr.mxu0 0.0
      %2455 = vmatpush1.msra.mxu0 %v2418
      %2456 = vmatprep.subr.mxu0 0.0
      %2457 = vmatpush1.msra.mxu0 %v2419
      %2458 = vmatprep.subr.mxu0 0.0
      %2459 = vmatpush1.msra.mxu0 %v2420
      %2460 = vmatprep.subr.mxu0 0.0
      %2461 = vmatpush1.msra.mxu0 0.0
      %2462 = vmatprep.subr.mxu0 0.0
      %2463 = vmatpush1.msra.mxu0 0.0
      %2464 = vmatprep.subr.mxu0 0.0
      %2465 = vmatpush1.msra.mxu0 0.0
      %2466 = vmatprep.subr.mxu0 0.0
      %2467 = vmatpush1.msra.mxu0 0.0
      %2468 = vmatprep.subr.mxu0 0.0
      %2469 = vmatpush1.msra.mxu0 0.0
      %2470 = vmatprep.subr.mxu0 0.0
      %2471 = vmatpush1.msra.mxu0 0.0
      %2472 = vmatprep.subr.mxu0 0.0
      %2473 = vmatpush1.msra.mxu0 0.0
      %2474 = vmatprep.subr.mxu0 0.0
      %2475 = vmatpush1.msra.mxu0 0.0
      %2476 = vmatprep.subr.mxu0 0.0
      %2477 = vmatpush1.msra.mxu0 0.0
      %2478 = vmatprep.subr.mxu0 0.0
      %2479 = vmatpush1.msra.mxu0 0.0
      %2480 = vmatprep.subr.mxu0 0.0
      %2481 = vmatpush1.msra.mxu0 0.0
      %2482 = vmatprep.subr.mxu0 0.0
      %2483 = vmatpush1.msra.mxu0 0.0
      %2484 = vmatprep.subr.mxu0 0.0
      %2485 = vmatpush1.msra.mxu0 0.0
      %2486 = vmatprep.subr.mxu0 0.0
      %2487 = vmatpush1.msra.mxu0 0.0
      %2488 = vmatprep.subr.mxu0 0.0
      %2489 = vmatpush1.msra.mxu0 0.0
      %2490 = vmatprep.subr.mxu0 0.0
      %2491 = vmatpush1.msra.mxu0 0.0
      %2492 = vmatprep.mubr.f32.mxu0 0.0
      %2493 = vmatmul.mubr.f32.gmra.mrb[0].mxu0 %v2396
      %v2494 = vpop.f32.mrb[0].mxu0
      %v2495 = vadd.f32 %v2426, %v2494
      %v2496 = vpop.f32.mrb[0].mxu0
      %2497 = vmatprep.mubr.f32.mxu0 0.0
      %2498 = vmatmul.mubr.f32.gmra.mrb[0].mxu0 %v2397
      %v2499 = vpop.f32.mrb[0].mxu0
      %v2500 = vadd.f32 %v2426, %v2499
      %v2501 = vpop.f32.mrb[0].mxu0
      %2502 = vdwg.mxu0
      %2503 = vst [vmem:[#allocation10] sm:$0xff] %v2495
      %2504 = vst [vmem:[#allocation10 + $0x8] sm:$0xff] %v2500
    $region41: #{tpu_custom_call.1} parent=1 // pred_fallthru
      _
    // Predicated region
    $region42: #{tpu_custom_call.1} parent=1 // pred_check
      _
    $region43: #{tpu_custom_call.1} parent=1 // pred_check_branch
      %2506 = sbr.rel (0) target = $region45
    $region44: #{tpu_custom_call.1} parent=1 // pred_region
      %s2508 = ssub.s32 256, 256
      %2509 = vsyncadd [#allocation7], %s2508
      %s2510 = sshll.u32 [#allocation10], 4
      %s2511 = int_to_ptr.vmem [resolvable:$true] %s2510
      %2516 = dma.vmem_to_hbm [thread:$0]  %s2511, 256, %s6, [#allocation7], 128, 128, 8
    $region45: #{tpu_custom_call.1} parent=1 // pred_fallthru
      _
    // Predicated region
    $region46: #{tpu_custom_call.1} parent=1 // pred_check
      _
    $region47: #{tpu_custom_call.1} parent=1 // pred_check_branch
      %2518 = sbr.rel (0) target = $region49
    $region48: #{tpu_custom_call.1} parent=1 // pred_region
      %2519 = dma.done [#allocation7], 256
    $region49: #{tpu_custom_call.1} parent=1 // pred_fallthru
      _
    %2520 = vsyncpa [#allocation6], 1
    %2521 = vsyncpa [#allocation9], 1
    %2522 = vsyncpa [#allocation7], 1

</llo_original>
